<compile_context>
chip_gen: v7x
topology: tpu7x:2x2x1
jax: 0.10.0
libtpu: 0.0.40
codegen_flags: <defaults>
</compile_context>

<pallas_src>
import functools

import jax
import jax.numpy as jnp
from jax.experimental import pallas as pl
from jax.experimental.pallas import tpu as pltpu


def _round_up(x, m):
    return (x + m - 1) // m * m


def _vector_field_kernel(n_heads, hidden, eps,
                         x_ref, te_ref,
                         gx_ref, bx_ref,
                         w1x_ref, w1t_ref, b1_ref, g1_ref, be1_ref,
                         w2_ref, b2_ref,
                         rw_ref,
                         o_ref):
    """Processes one batch tile: x [TB, dim] -> out [TB, dim]."""
    x = x_ref[...].astype(jnp.float32)                              # [TB, dim]

    # ---- input LayerNorm (f32) -------------------------------------------
    mu = jnp.mean(x, axis=-1, keepdims=True)
    var = jnp.mean((x - mu) ** 2, axis=-1, keepdims=True)
    xn = (x - mu) * jax.lax.rsqrt(var + eps)
    xn = xn * gx_ref[...] + bx_ref[...]                             # affine [1, dim]

    # ---- fused first Linear of all heads (split-K; no lane concat) --------
    # h1[:, h*hidden + j] = sum_k [xn | t_enc][:, k] * W1[h, k, j] + b1[h, j]
    h1 = jnp.dot(xn.astype(jnp.bfloat16), w1x_ref[...],
                 preferred_element_type=jnp.float32)
    h1 = h1 + jnp.dot(te_ref[...].astype(jnp.bfloat16), w1t_ref[...],
                      preferred_element_type=jnp.float32)
    h1 = h1 + b1_ref[...]                                           # [TB, H*hid] f32

    # ---- per-head LayerNorm: stats over each head's hidden chunk ---------
    tb = h1.shape[0]
    h3 = h1.reshape(tb, n_heads, hidden)
    mu1 = jnp.mean(h3, axis=-1, keepdims=True)
    var1 = jnp.mean((h3 - mu1) ** 2, axis=-1, keepdims=True)
    h3 = (h3 - mu1) * jax.lax.rsqrt(var1 + eps)
    hn = h3.reshape(tb, n_heads * hidden)
    hn = hn * g1_ref[...] + be1_ref[...]                            # per-head affine

    # ---- SiLU (Dropout = identity at inference) ---------------------------
    act = hn * jax.nn.sigmoid(hn)

    # ---- fused second Linear (W2 pre-scaled by 1/H, b2 pre-averaged) ------
    out = jnp.dot(act.astype(jnp.bfloat16), w2_ref[...],
                  preferred_element_type=jnp.float32)
    out = out + b2_ref[...] + rw_ref[0, 0] * x                      # residual
    o_ref[...] = out.astype(o_ref.dtype)


def prep_params(params):
    """Fuse / transpose / cast module parameters into kernel operands."""
    n_heads, d_in, hidden = params["w1"].shape
    dim = params["w2"].shape[2]
    hh = n_heads * hidden

    # W1: [H, dim+t_dim, hid] -> [dim+t_dim, H*hid], split into x-part / t-part.
    w1f = jnp.transpose(params["w1"], (1, 0, 2)).reshape(d_in, hh)
    # W2: [H, hid, dim] -> [H*hid, dim], pre-scaled by 1/H (mean over heads).
    w2f = (params["w2"].reshape(hh, dim) / n_heads)

    return {
        "dims": (dim, d_in - dim, hidden, n_heads),
        "fW":  params["fW"].astype(jnp.float32),
        "gx":  params["gx"].reshape(1, dim).astype(jnp.float32),
        "bx":  params["bx"].reshape(1, dim).astype(jnp.float32),
        "w1x": w1f[:dim].astype(jnp.bfloat16),
        "w1t": w1f[dim:].astype(jnp.bfloat16),
        "b1":  params["b1"].reshape(1, hh).astype(jnp.float32),
        "g1":  params["g1"].reshape(1, hh).astype(jnp.float32),
        "be1": params["be1"].reshape(1, hh).astype(jnp.float32),
        "w2":  w2f.astype(jnp.bfloat16),
        "b2":  jnp.mean(params["b2"], axis=0, keepdims=True).astype(jnp.float32),
        "rw":  params["rw"].reshape(1, 1).astype(jnp.float32),
    }


def vector_field_forward(prepped, x, t, *, eps=1e-5, tile_b=256):
    """x: [B, dim]; t: scalar, [B], or [B, 1]. Returns [B, dim]."""
    dim, t_dim, hidden, n_heads = prepped["dims"]
    B = x.shape[0]
    assert x.shape[1] == dim

    # ---- Gaussian Fourier time encoding, lane-dense [B, t_dim] (f32) ------
    t = jnp.asarray(t, jnp.float32)
    if t.ndim == 0:
        t = jnp.full((B, 1), t, jnp.float32)
    elif t.ndim == 1:
        t = t[:, None]
    proj = t * prepped["fW"]                                        # [B, t_dim//2]
    t_enc = jnp.concatenate([jnp.sin(proj), jnp.cos(proj)], axis=-1)

    # ---- batch tiling (pad to a tile multiple; garbage rows sliced off) ---
    tile_b = _round_up(min(tile_b, _round_up(B, 8)), 8)
    b_pad = _round_up(B, tile_b)
    if b_pad != B:
        x_in = jnp.pad(x, ((0, b_pad - B), (0, 0)))
        t_enc = jnp.pad(t_enc, ((0, b_pad - B), (0, 0)))
    else:
        x_in = x
    n_tiles = b_pad // tile_b
    hh = n_heads * hidden

    def tile_spec(cols):
        return pl.BlockSpec((tile_b, cols), lambda i: (i, 0))

    def resident_spec(a):                       # whole array, fetched once
        return pl.BlockSpec(a.shape, lambda i: (0, 0))

    # ---- VMEM budget: resident weights (x2 buffering) + pipelined tiles ---
    weight_bytes = sum(int(v.size) * v.dtype.itemsize
                       for k, v in prepped.items()
                       if k not in ("dims", "fW", "rw"))
    tile_bytes = tile_b * (2 * dim + t_dim) * 4
    inter_bytes = 4 * tile_b * hh * 4
    vmem_limit = int(min(64 * 2 ** 20,
                         max(16 * 2 ** 20,
                             2 * weight_bytes + 2 * tile_bytes + inter_bytes)))

    kernel = functools.partial(_vector_field_kernel, n_heads, hidden, eps)

    out = pl.pallas_call(
        kernel,
        out_shape=jax.ShapeDtypeStruct((b_pad, dim), x.dtype),
        grid=(n_tiles,),
        in_specs=[
            tile_spec(dim),                       # x
            tile_spec(t_dim),                     # t_enc
            resident_spec(prepped["gx"]),
            resident_spec(prepped["bx"]),
            resident_spec(prepped["w1x"]),
            resident_spec(prepped["w1t"]),
            resident_spec(prepped["b1"]),
            resident_spec(prepped["g1"]),
            resident_spec(prepped["be1"]),
            resident_spec(prepped["w2"]),
            resident_spec(prepped["b2"]),
            pl.BlockSpec((1, 1), lambda i: (0, 0),
                         memory_space=pltpu.MemorySpace.SMEM),   # res_weight
        ],
        out_specs=tile_spec(dim),
        compiler_params=pltpu.CompilerParams(
            dimension_semantics=("parallel",),
            vmem_limit_bytes=vmem_limit),
    )(x_in, t_enc,
      prepped["gx"], prepped["bx"],
      prepped["w1x"], prepped["w1t"], prepped["b1"], prepped["g1"], prepped["be1"],
      prepped["w2"], prepped["b2"],
      prepped["rw"])

    return out[:B] if b_pad != B else out


def init_params(key, *, dim, t_dim, hidden_dim, n_heads):
    """Deterministic parameter init mirroring the module's shapes (f32 master copy).
    Linear weights Kaiming-uniform (relu gain), biases zero, LayerNorm affine = (1, 0)."""
    k_fw, k_w1, k_w2 = jax.random.split(key, 3)

    fW = jax.random.normal(k_fw, (1, t_dim // 2), jnp.float32) * 10.0  # non-trainable

    bound1 = (6.0 / (dim + t_dim)) ** 0.5
    w1 = jax.random.uniform(k_w1, (n_heads, dim + t_dim, hidden_dim),
                            jnp.float32, -bound1, bound1)
    b1 = jnp.zeros((n_heads, hidden_dim), jnp.float32)

    bound2 = (6.0 / hidden_dim) ** 0.5
    w2 = jax.random.uniform(k_w2, (n_heads, hidden_dim, dim),
                            jnp.float32, -bound2, bound2)
    b2 = jnp.zeros((n_heads, dim), jnp.float32)

    return {
        "fW": fW,
        "gx": jnp.ones((1, dim), jnp.float32),
        "bx": jnp.zeros((1, dim), jnp.float32),
        "w1": w1, "b1": b1,
        "g1": jnp.ones((n_heads, hidden_dim), jnp.float32),
        "be1": jnp.zeros((n_heads, hidden_dim), jnp.float32),
        "w2": w2, "b2": b2,
        "rw": jnp.ones((1, 1), jnp.float32),                 # res_weight, init 1.0
    }


def _reference_forward(params, x, t, eps=1e-5):
    """Pure-JAX f32 reference with exact module semantics."""
    if t.ndim == 1:
        t = t[:, None]

    def ln(v, g, b):
        mu = jnp.mean(v, -1, keepdims=True)
        var = jnp.mean((v - mu) ** 2, -1, keepdims=True)
        return (v - mu) / jnp.sqrt(var + eps) * g + b

    xn = ln(x, params["gx"], params["bx"])
    proj = t * params["fW"]
    inp = jnp.concatenate([xn, jnp.sin(proj), jnp.cos(proj)], -1)

    outs = []
    for h in range(params["w1"].shape[0]):
        h1 = inp @ params["w1"][h] + params["b1"][h]
        h1 = ln(h1, params["g1"][h], params["be1"][h])
        h1 = jax.nn.silu(h1)
        outs.append(h1 @ params["w2"][h] + params["b2"][h])
    return jnp.mean(jnp.stack(outs), 0) + params["rw"][0, 0] * x


def _matched_reference(prepped, x, t, eps=1e-5):
    """Pure-JAX reference using the same fused/bf16 recipe as the kernel."""
    dim, t_dim, hidden, n_heads = prepped["dims"]
    t = jnp.asarray(t, jnp.float32)
    if t.ndim == 0:
        t = jnp.full((x.shape[0], 1), t, jnp.float32)
    elif t.ndim == 1:
        t = t[:, None]
    proj = t * prepped["fW"]
    t_enc = jnp.concatenate([jnp.sin(proj), jnp.cos(proj)], -1)

    xf = x.astype(jnp.float32)
    mu = xf.mean(-1, keepdims=True)
    var = ((xf - mu) ** 2).mean(-1, keepdims=True)
    xn = (xf - mu) * jax.lax.rsqrt(var + eps) * prepped["gx"] + prepped["bx"]

    h1 = (jnp.dot(xn.astype(jnp.bfloat16), prepped["w1x"],
                  preferred_element_type=jnp.float32)
          + jnp.dot(t_enc.astype(jnp.bfloat16), prepped["w1t"],
                    preferred_element_type=jnp.float32)
          + prepped["b1"])
    h3 = h1.reshape(-1, n_heads, hidden)
    mu1 = h3.mean(-1, keepdims=True)
    var1 = ((h3 - mu1) ** 2).mean(-1, keepdims=True)
    hn = ((h3 - mu1) * jax.lax.rsqrt(var1 + eps)).reshape(-1, n_heads * hidden)
    hn = hn * prepped["g1"] + prepped["be1"]
    act = hn * jax.nn.sigmoid(hn)
    out = (jnp.dot(act.astype(jnp.bfloat16), prepped["w2"],
                   preferred_element_type=jnp.float32)
           + prepped["b2"] + prepped["rw"][0, 0] * xf)
    return out.astype(x.dtype)


if __name__ == "__main__":
    # Small deterministic test: B not divisible by the batch tile to exercise
    # the grid (4 tiles of 16 rows) and the pad+slice path.
    B, dim, t_dim, hidden_dim, n_heads = 50, 128, 32, 128, 4

    key = jax.random.PRNGKey(0)
    k_params, k_x, k_t = jax.random.split(key, 3)

    params = init_params(k_params, dim=dim, t_dim=t_dim,
                         hidden_dim=hidden_dim, n_heads=n_heads)
    prepped = prep_params(params)
    x = jax.random.normal(k_x, (B, dim), jnp.float32)
    t = jax.random.uniform(k_t, (B,), jnp.float32)

    out = vector_field_forward(prepped, x, t, tile_b=16)
    out = jax.block_until_ready(out)
    assert out.shape == (B, dim)

    ref_matched = _matched_reference(prepped, x, t)       # same bf16/fused recipe
    ref_f32 = _reference_forward(params, x, t)            # exact module semantics, f32
    assert jnp.allclose(out, ref_matched, rtol=5e-3, atol=5e-3), "mismatch vs matched ref"
    assert jnp.allclose(out, ref_f32, rtol=5e-2, atol=5e-2), "mismatch vs f32 reference"

    print("KERNEL_OK")
</pallas_src>

<mosaic_0001>
module attributes {stable_mosaic.version = 11 : i64} {
  func.func @_vector_field_kernel(%arg0: i32, %arg1: memref<16x128xf32, #tpu.memory_space<vmem>>, %arg2: memref<16x32xf32, #tpu.memory_space<vmem>>, %arg3: memref<1x128xf32, #tpu.memory_space<vmem>>, %arg4: memref<1x128xf32, #tpu.memory_space<vmem>>, %arg5: memref<128x512xbf16, #tpu.memory_space<vmem>>, %arg6: memref<32x512xbf16, #tpu.memory_space<vmem>>, %arg7: memref<1x512xf32, #tpu.memory_space<vmem>>, %arg8: memref<1x512xf32, #tpu.memory_space<vmem>>, %arg9: memref<1x512xf32, #tpu.memory_space<vmem>>, %arg10: memref<512x128xbf16, #tpu.memory_space<vmem>>, %arg11: memref<1x128xf32, #tpu.memory_space<vmem>>, %arg12: memref<1x1xf32, #tpu.memory_space<smem>>, %arg13: memref<16x128xf32, #tpu.memory_space<vmem>>) attributes {dimension_semantics = [#tpu.dimension_semantics<parallel>], iteration_bounds = array<i64: 4>, scalar_prefetch = 0 : i64, scratch_operands = 0 : i64, tpu.core_type = #tpu.core_type<tc>, window_params = [{transform_indices = @transform_0, window_bounds = array<i64: 16, 128>}, {transform_indices = @transform_1, window_bounds = array<i64: 16, 32>}, {pipeline_mode = #tpu.pipeline_mode<synchronous>, transform_indices = @transform_2, window_bounds = array<i64: 1, 128>}, {pipeline_mode = #tpu.pipeline_mode<synchronous>, transform_indices = @transform_3, window_bounds = array<i64: 1, 128>}, {pipeline_mode = #tpu.pipeline_mode<synchronous>, transform_indices = @transform_4, window_bounds = array<i64: 128, 512>}, {pipeline_mode = #tpu.pipeline_mode<synchronous>, transform_indices = @transform_5, window_bounds = array<i64: 32, 512>}, {pipeline_mode = #tpu.pipeline_mode<synchronous>, transform_indices = @transform_6, window_bounds = array<i64: 1, 512>}, {pipeline_mode = #tpu.pipeline_mode<synchronous>, transform_indices = @transform_7, window_bounds = array<i64: 1, 512>}, {pipeline_mode = #tpu.pipeline_mode<synchronous>, transform_indices = @transform_8, window_bounds = array<i64: 1, 512>}, {pipeline_mode = #tpu.pipeline_mode<synchronous>, transform_indices = @transform_9, window_bounds = array<i64: 512, 128>}, {pipeline_mode = #tpu.pipeline_mode<synchronous>, transform_indices = @transform_10, window_bounds = array<i64: 1, 128>}, {transform_indices = @transform_11, window_bounds = array<i64: 1, 1>}, {transform_indices = @transform_12, window_bounds = array<i64: 16, 128>}]} {
    %c0 = arith.constant 0 : index
    %c0_0 = arith.constant 0 : index
    %0 = vector.load %arg1[%c0, %c0_0] : memref<16x128xf32, #tpu.memory_space<vmem>>, vector<16x128xf32>
    %cst = arith.constant dense<0.000000e+00> : vector<16xf32>
    %1 = vector.multi_reduction <add>, %0, %cst [1] : vector<16x128xf32> to vector<16xf32>
    %2 = vector.shape_cast %1 : vector<16xf32> to vector<16x1xf32>
    %cst_1 = arith.constant 1.280000e+02 : f32
    %3 = vector.broadcast %cst_1 : f32 to vector<16x1xf32>
    %4 = arith.divf %2, %3 : vector<16x1xf32>
    %5 = vector.broadcast %4 : vector<16x1xf32> to vector<16x128xf32>
    %6 = arith.subf %0, %5 : vector<16x128xf32>
    %7 = arith.mulf %6, %6 : vector<16x128xf32>
    %cst_2 = arith.constant dense<0.000000e+00> : vector<16xf32>
    %8 = vector.multi_reduction <add>, %7, %cst_2 [1] : vector<16x128xf32> to vector<16xf32>
    %9 = vector.shape_cast %8 : vector<16xf32> to vector<16x1xf32>
    %cst_3 = arith.constant 1.280000e+02 : f32
    %10 = vector.broadcast %cst_3 : f32 to vector<16x1xf32>
    %11 = arith.divf %9, %10 : vector<16x1xf32>
    %12 = vector.broadcast %4 : vector<16x1xf32> to vector<16x128xf32>
    %13 = arith.subf %0, %12 : vector<16x128xf32>
    %cst_4 = arith.constant 9.99999974E-6 : f32
    %14 = vector.broadcast %cst_4 : f32 to vector<16x1xf32>
    %15 = arith.addf %11, %14 : vector<16x1xf32>
    %16 = math.rsqrt %15 : vector<16x1xf32>
    %17 = vector.broadcast %16 : vector<16x1xf32> to vector<16x128xf32>
    %18 = arith.mulf %13, %17 : vector<16x128xf32>
    %c0_5 = arith.constant 0 : index
    %c0_6 = arith.constant 0 : index
    %19 = vector.load %arg3[%c0_5, %c0_6] : memref<1x128xf32, #tpu.memory_space<vmem>>, vector<1x128xf32>
    %20 = vector.broadcast %19 : vector<1x128xf32> to vector<16x128xf32>
    %21 = arith.mulf %18, %20 : vector<16x128xf32>
    %c0_7 = arith.constant 0 : index
    %c0_8 = arith.constant 0 : index
    %22 = vector.load %arg4[%c0_7, %c0_8] : memref<1x128xf32, #tpu.memory_space<vmem>>, vector<1x128xf32>
    %23 = vector.broadcast %22 : vector<1x128xf32> to vector<16x128xf32>
    %24 = arith.addf %21, %23 : vector<16x128xf32>
    %25 = arith.truncf %24 : vector<16x128xf32> to vector<16x128xbf16>
    %c0_9 = arith.constant 0 : index
    %c0_10 = arith.constant 0 : index
    %26 = vector.load %arg5[%c0_9, %c0_10] : memref<128x512xbf16, #tpu.memory_space<vmem>>, vector<128x512xbf16>
    %cst_11 = arith.constant dense<0.000000e+00> : vector<16x512xf32>
    %27 = tpu.matmul %25, %26, %cst_11 {dimension_numbers = #tpu.dot_dimension_numbers<[1], [0], [0], [1], [0, 0, 1, 1], [], []>} : vector<16x128xbf16>, vector<128x512xbf16>, vector<16x512xf32> -> vector<16x512xf32>
    %c0_12 = arith.constant 0 : index
    %c0_13 = arith.constant 0 : index
    %28 = vector.load %arg2[%c0_12, %c0_13] : memref<16x32xf32, #tpu.memory_space<vmem>>, vector<16x32xf32>
    %29 = arith.truncf %28 : vector<16x32xf32> to vector<16x32xbf16>
    %c0_14 = arith.constant 0 : index
    %c0_15 = arith.constant 0 : index
    %30 = vector.load %arg6[%c0_14, %c0_15] : memref<32x512xbf16, #tpu.memory_space<vmem>>, vector<32x512xbf16>
    %cst_16 = arith.constant dense<0.000000e+00> : vector<16x512xf32>
    %31 = tpu.matmul %29, %30, %cst_16 {dimension_numbers = #tpu.dot_dimension_numbers<[1], [0], [0], [1], [0, 0, 1, 1], [], []>} : vector<16x32xbf16>, vector<32x512xbf16>, vector<16x512xf32> -> vector<16x512xf32>
    %32 = arith.addf %27, %31 : vector<16x512xf32>
    %c0_17 = arith.constant 0 : index
    %c0_18 = arith.constant 0 : index
    %33 = vector.load %arg7[%c0_17, %c0_18] : memref<1x512xf32, #tpu.memory_space<vmem>>, vector<1x512xf32>
    %34 = vector.broadcast %33 : vector<1x512xf32> to vector<16x512xf32>
    %35 = arith.addf %32, %34 : vector<16x512xf32>
    %36 = vector.shape_cast %35 : vector<16x512xf32> to vector<16x4x128xf32>
    %cst_19 = arith.constant dense<0.000000e+00> : vector<16x4xf32>
    %37 = vector.multi_reduction <add>, %36, %cst_19 [2] : vector<16x4x128xf32> to vector<16x4xf32>
    %38 = vector.shape_cast %37 : vector<16x4xf32> to vector<16x4x1xf32>
    %cst_20 = arith.constant 1.280000e+02 : f32
    %39 = vector.broadcast %cst_20 : f32 to vector<16x4x1xf32>
    %40 = arith.divf %38, %39 : vector<16x4x1xf32>
    %41 = vector.broadcast %40 : vector<16x4x1xf32> to vector<16x4x128xf32>
    %42 = arith.subf %36, %41 : vector<16x4x128xf32>
    %43 = arith.mulf %42, %42 : vector<16x4x128xf32>
    %cst_21 = arith.constant dense<0.000000e+00> : vector<16x4xf32>
    %44 = vector.multi_reduction <add>, %43, %cst_21 [2] : vector<16x4x128xf32> to vector<16x4xf32>
    %45 = vector.shape_cast %44 : vector<16x4xf32> to vector<16x4x1xf32>
    %cst_22 = arith.constant 1.280000e+02 : f32
    %46 = vector.broadcast %cst_22 : f32 to vector<16x4x1xf32>
    %47 = arith.divf %45, %46 : vector<16x4x1xf32>
    %48 = vector.broadcast %40 : vector<16x4x1xf32> to vector<16x4x128xf32>
    %49 = arith.subf %36, %48 : vector<16x4x128xf32>
    %cst_23 = arith.constant 9.99999974E-6 : f32
    %50 = vector.broadcast %cst_23 : f32 to vector<16x4x1xf32>
    %51 = arith.addf %47, %50 : vector<16x4x1xf32>
    %52 = math.rsqrt %51 : vector<16x4x1xf32>
    %53 = vector.broadcast %52 : vector<16x4x1xf32> to vector<16x4x128xf32>
    %54 = arith.mulf %49, %53 : vector<16x4x128xf32>
    %55 = vector.shape_cast %54 : vector<16x4x128xf32> to vector<16x512xf32>
    %c0_24 = arith.constant 0 : index
    %c0_25 = arith.constant 0 : index
    %56 = vector.load %arg8[%c0_24, %c0_25] : memref<1x512xf32, #tpu.memory_space<vmem>>, vector<1x512xf32>
    %57 = vector.broadcast %56 : vector<1x512xf32> to vector<16x512xf32>
    %58 = arith.mulf %55, %57 : vector<16x512xf32>
    %c0_26 = arith.constant 0 : index
    %c0_27 = arith.constant 0 : index
    %59 = vector.load %arg9[%c0_26, %c0_27] : memref<1x512xf32, #tpu.memory_space<vmem>>, vector<1x512xf32>
    %60 = vector.broadcast %59 : vector<1x512xf32> to vector<16x512xf32>
    %61 = arith.addf %58, %60 : vector<16x512xf32>
    %62 = arith.negf %61 : vector<16x512xf32>
    %63 = math.exp %62 : vector<16x512xf32>
    %cst_28 = arith.constant 1.000000e+00 : f32
    %64 = vector.broadcast %cst_28 : f32 to vector<16x512xf32>
    %65 = arith.addf %64, %63 : vector<16x512xf32>
    %66 = arith.divf %64, %65 : vector<16x512xf32>
    %67 = arith.mulf %61, %66 : vector<16x512xf32>
    %68 = arith.truncf %67 : vector<16x512xf32> to vector<16x512xbf16>
    %c0_29 = arith.constant 0 : index
    %c0_30 = arith.constant 0 : index
    %69 = vector.load %arg10[%c0_29, %c0_30] : memref<512x128xbf16, #tpu.memory_space<vmem>>, vector<512x128xbf16>
    %cst_31 = arith.constant dense<0.000000e+00> : vector<16x128xf32>
    %70 = tpu.matmul %68, %69, %cst_31 {dimension_numbers = #tpu.dot_dimension_numbers<[1], [0], [0], [1], [0, 0, 1, 1], [], []>} : vector<16x512xbf16>, vector<512x128xbf16>, vector<16x128xf32> -> vector<16x128xf32>
    %c0_32 = arith.constant 0 : index
    %c0_33 = arith.constant 0 : index
    %71 = vector.load %arg11[%c0_32, %c0_33] : memref<1x128xf32, #tpu.memory_space<vmem>>, vector<1x128xf32>
    %72 = vector.broadcast %71 : vector<1x128xf32> to vector<16x128xf32>
    %73 = arith.addf %70, %72 : vector<16x128xf32>
    %c0_34 = arith.constant 0 : index
    %c0_35 = arith.constant 0 : index
    %74 = memref.load %arg12[%c0_34, %c0_35] : memref<1x1xf32, #tpu.memory_space<smem>>
    %75 = vector.broadcast %74 : f32 to vector<16x128xf32>
    %76 = arith.mulf %75, %0 : vector<16x128xf32>
    %77 = arith.addf %73, %76 : vector<16x128xf32>
    %c0_36 = arith.constant 0 : index
    %c0_37 = arith.constant 0 : index
    %78 = vector.load %arg13[%c0_36, %c0_37] : memref<16x128xf32, #tpu.memory_space<vmem>>, vector<16x128xf32>
    tpu.vector_store %arg13[%c0_36, %c0_37], %77 {strides = array<i32>} : memref<16x128xf32, #tpu.memory_space<vmem>>, vector<16x128xf32>,
    return
  }
  func.func @transform_0(%arg0: i32) -> (i32, i32) {
    %c0_i32 = arith.constant 0 : i32
    %c0_i32_0 = arith.constant 0 : i32
    return %arg0, %c0_i32 : i32, i32
  }
  func.func @transform_1(%arg0: i32) -> (i32, i32) {
    %c0_i32 = arith.constant 0 : i32
    %c0_i32_0 = arith.constant 0 : i32
    return %arg0, %c0_i32 : i32, i32
  }
  func.func @transform_2(%arg0: i32) -> (i32, i32) {
    %c0_i32 = arith.constant 0 : i32
    %c0_i32_0 = arith.constant 0 : i32
    %c0_i32_1 = arith.constant 0 : i32
    return %c0_i32, %c0_i32_0 : i32, i32
  }
  func.func @transform_3(%arg0: i32) -> (i32, i32) {
    %c0_i32 = arith.constant 0 : i32
    %c0_i32_0 = arith.constant 0 : i32
    %c0_i32_1 = arith.constant 0 : i32
    return %c0_i32, %c0_i32_0 : i32, i32
  }
  func.func @transform_4(%arg0: i32) -> (i32, i32) {
    %c0_i32 = arith.constant 0 : i32
    %c0_i32_0 = arith.constant 0 : i32
    %c0_i32_1 = arith.constant 0 : i32
    return %c0_i32, %c0_i32_0 : i32, i32
  }
  func.func @transform_5(%arg0: i32) -> (i32, i32) {
    %c0_i32 = arith.constant 0 : i32
    %c0_i32_0 = arith.constant 0 : i32
    %c0_i32_1 = arith.constant 0 : i32
    return %c0_i32, %c0_i32_0 : i32, i32
  }
  func.func @transform_6(%arg0: i32) -> (i32, i32) {
    %c0_i32 = arith.constant 0 : i32
    %c0_i32_0 = arith.constant 0 : i32
    %c0_i32_1 = arith.constant 0 : i32
    return %c0_i32, %c0_i32_0 : i32, i32
  }
  func.func @transform_7(%arg0: i32) -> (i32, i32) {
    %c0_i32 = arith.constant 0 : i32
    %c0_i32_0 = arith.constant 0 : i32
    %c0_i32_1 = arith.constant 0 : i32
    return %c0_i32, %c0_i32_0 : i32, i32
  }
  func.func @transform_8(%arg0: i32) -> (i32, i32) {
    %c0_i32 = arith.constant 0 : i32
    %c0_i32_0 = arith.constant 0 : i32
    %c0_i32_1 = arith.constant 0 : i32
    return %c0_i32, %c0_i32_0 : i32, i32
  }
  func.func @transform_9(%arg0: i32) -> (i32, i32) {
    %c0_i32 = arith.constant 0 : i32
    %c0_i32_0 = arith.constant 0 : i32
    %c0_i32_1 = arith.constant 0 : i32
    return %c0_i32, %c0_i32_0 : i32, i32
  }
  func.func @transform_10(%arg0: i32) -> (i32, i32) {
    %c0_i32 = arith.constant 0 : i32
    %c0_i32_0 = arith.constant 0 : i32
    %c0_i32_1 = arith.constant 0 : i32
    return %c0_i32, %c0_i32_0 : i32, i32
  }
  func.func @transform_11(%arg0: i32) -> (i32, i32) {
    %c0_i32 = arith.constant 0 : i32
    %c0_i32_0 = arith.constant 0 : i32
    %c0_i32_1 = arith.constant 0 : i32
    return %c0_i32, %c0_i32_0 : i32, i32
  }
  func.func @transform_12(%arg0: i32) -> (i32, i32) {
    %c0_i32 = arith.constant 0 : i32
    %c0_i32_0 = arith.constant 0 : i32
    return %arg0, %c0_i32 : i32, i32
  }
}

</mosaic_0001>

<llo_original>
// kernel: tpu_custom_call.1
$region0: #{tpu_custom_call.1}
  #allocation0 [shape = 'u32[]', space=smem, size = 0x4, offset = 0x4, fixed_abs, tag = 'smem constant byte address 0x4 - core index']
  #allocation1 [shape = 'u32[144,128]{1,0:T(1,128)}', space=vmem, size = 0x12000, scoped, tag = 'internal scratch']
  #allocation2 [shape = 'f32[1,1]{1,0:T(1,128)S(6)}', space=smem, size = 0x200, scoped, tag = 'scoped memory for tpu_custom_call.1']
  %s0 = inlined_call_operand.vmem [shape: f32[64,128], index: 0, kind: input, shape index: {}]
  %s1 = inlined_call_operand.vmem [shape: f32[64,32], index: 1, kind: input, shape index: {}]
  %s2 = inlined_call_operand.vmem [shape: f32[1,128], index: 2, kind: input, shape index: {}]
  %s3 = inlined_call_operand.vmem [shape: f32[1,128], index: 3, kind: input, shape index: {}]
  %s4 = inlined_call_operand.hbm [shape: bf16[128,512], index: 4, kind: input, shape index: {}]
  %s5 = inlined_call_operand.hbm [shape: bf16[32,512], index: 5, kind: input, shape index: {}]
  %s6 = inlined_call_operand.vmem [shape: f32[1,512], index: 6, kind: input, shape index: {}]
  %s7 = inlined_call_operand.vmem [shape: f32[1,512], index: 7, kind: input, shape index: {}]
  %s8 = inlined_call_operand.vmem [shape: f32[1,512], index: 8, kind: input, shape index: {}]
  %s9 = inlined_call_operand.hbm [shape: bf16[512,128], index: 9, kind: input, shape index: {}]
  %s10 = inlined_call_operand.vmem [shape: f32[1,128], index: 10, kind: input, shape index: {}]
  %s11 = inlined_call_operand.<no memory space> [shape: f32[1,1], index: 11, kind: input, shape index: {}]
  %s12 = inlined_call_operand.hbm [shape: f32[64,128], index: 12, kind: output, shape index: {}]
  %s13 = sld [smem:[#allocation0]]
  $region93: #{tpu_custom_call.1} parent=0
    _
  %s15 = ssub.s32 1, %s13
  %s16 = scalar_select 0, %s15, %s13
  %17 = sst [smem:[#allocation2]] %s11
  $region1: #{tpu_custom_call.1} parent=0
    #allocation3 [shape = 'u8[131072]{0}', space=vmem, size = 0x20000, scoped, tag = 'input window, operand 4, single buffered']
    #allocation4 [shape = 's32[2]{0}', space=sflag, size = 0x8, scoped, tag = 'scoped memory for tpu_custom_call.1']
    #allocation5 [shape = 's32[2]{0}', space=sflag, size = 0x8, scoped, tag = 'scoped memory for tpu_custom_call.1']
    #allocation6 [shape = 'u8[32768]{0}', space=vmem, size = 0x8000, scoped, tag = 'input window, operand 5, single buffered']
    #allocation7 [shape = 's32[1]{0}', space=sflag, size = 0x4, scoped, tag = 'scoped memory for tpu_custom_call.1']
    #allocation8 [shape = 'u8[131072]{0}', space=vmem, size = 0x20000, scoped, tag = 'input window, operand 9, single buffered']
    #allocation9 [shape = 'u8[16384]{0}', space=vmem, size = 0x4000, scoped, tag = 'output window, operand 0']
    %18 = vsyncpa [#allocation4], 0
    %19 = vsyncpa [#allocation7], 0
    %20 = vsyncpa [#allocation5], 0
    %s21 = scalar_lea.sflag [#allocation5], 1
    %22 = vsyncpa %s21, 0
    loop: start=0, step=1, limit=6
    $region2: #{tpu_custom_call.1} parent=1 // loop_pre_header
      _
    $region3: #{tpu_custom_call.1} parent=1 // loop_header
      %s24 = sphi 0, %s28
      %p25 = scmp.ge.s32.totalorder %s24, 6
      %s34 = sphi 0, %s36
      %s37 = sphi 0, %s34
      %s38 = sphi 0, %s37
      %s54 = sphi 0, %s38
      %s60 = sphi 0, %s62
      %s63 = sphi 0, %s60
      %s64 = sphi 0, %s63
      %s80 = sphi 0, %s64
      %s84 = sphi 0, %s84
      %s86 = sphi 0, %s84
      %s87 = sphi 0, %s86
      %s101 = sphi 0, %s87
      %s105 = sphi 0, %s105
      %s107 = sphi 0, %s105
      %s108 = sphi 0, %s107
      %s122 = sphi 0, %s108
      %s126 = sphi 0, %s126
      %s128 = sphi 0, %s126
      %s129 = sphi 0, %s128
      %s143 = sphi 0, %s129
      %s147 = sphi 0, %s147
      %s149 = sphi 0, %s147
      %s150 = sphi 0, %s149
      %s164 = sphi 0, %s150
      %s168 = sphi 0, %s168
      %s170 = sphi 0, %s168
      %s171 = sphi 0, %s170
      %s185 = sphi 0, %s171
      %s189 = sphi 0, %s189
      %s191 = sphi 0, %s189
      %s192 = sphi 0, %s191
      %s206 = sphi 0, %s192
      %s210 = sphi 0, %s210
      %s212 = sphi 0, %s210
      %s213 = sphi 0, %s212
      %s227 = sphi 0, %s213
      %s231 = sphi 0, %s231
      %s233 = sphi 0, %s231
      %s234 = sphi 0, %s233
      %s248 = sphi 0, %s234
      %s252 = sphi 0, %s252
      %s254 = sphi 0, %s252
      %s255 = sphi 0, %s254
      %s269 = sphi 0, %s255
      %s273 = sphi 0, %s273
      %s275 = sphi 0, %s273
      %s276 = sphi 0, %s275
      %s290 = sphi 0, %s276
      %s296 = sphi 0, %s298
      %s299 = sphi 0, %s296
      %s300 = sphi 0, %s299
      %s316 = sphi 0, %s300
    $region4: #{tpu_custom_call.1} parent=1 // loop_header_branch
      %27 = sbr.rel (%p25) target = $region8
    $region5: #{tpu_custom_call.1} parent=1 // loop_body
      %s29 = ssub.s32 %s24, 1
      %s30 = ssub.s32 %s24, 2
      %s31 = sadd.s32 %s24, 1
      %s32 = ssub.s32 %s24, %s31
      %p33 = scmp.eq.s32.totalorder %s32, 0
      %s35 = sadd.s32 %s34, 1
      %s36 = scalar_select %p33, %s34, %s35
      %p39 = pneg %p33
      %p40 = scmp.eq.s32.totalorder %s24, 3
      %p41 = por %p39, %p40
      %p42 = scmp.ne.s32.totalorder %s34, %s37
      %p43 = scmp.eq.s32.totalorder %s24, 0
      %p44 = por %p42, %p43
      %p45 = scmp.ne.s32.totalorder %s34, %s37
      %p46 = scmp.eq.s32.totalorder %s29, 3
      %p47 = por %p45, %p46
      %p48 = scmp.ne.s32.totalorder %s37, %s38
      %p49 = scmp.eq.s32.totalorder %s29, 0
      %p50 = por %p48, %p49
      %p51 = scmp.ne.s32.totalorder %s37, %s38
      %p52 = scmp.eq.s32.totalorder %s30, 3
      %p53 = por %p51, %p52
      %p55 = scmp.ne.s32.totalorder %s38, %s54
      %p56 = scmp.eq.s32.totalorder %s30, 0
      %p57 = por %p55, %p56
      %s58 = ssub.s32 %s24, %s31
      %p59 = scmp.eq.s32.totalorder %s58, 0
      %s61 = sadd.s32 %s60, 1
      %s62 = scalar_select %p59, %s60, %s61
      %p65 = pneg %p59
      %p66 = scmp.eq.s32.totalorder %s24, 3
      %p67 = por %p65, %p66
      %p68 = scmp.ne.s32.totalorder %s60, %s63
      %p69 = scmp.eq.s32.totalorder %s24, 0
      %p70 = por %p68, %p69
      %p71 = scmp.ne.s32.totalorder %s60, %s63
      %p72 = scmp.eq.s32.totalorder %s29, 3
      %p73 = por %p71, %p72
      %p74 = scmp.ne.s32.totalorder %s63, %s64
      %p75 = scmp.eq.s32.totalorder %s29, 0
      %p76 = por %p74, %p75
      %p77 = scmp.ne.s32.totalorder %s63, %s64
      %p78 = scmp.eq.s32.totalorder %s30, 3
      %p79 = por %p77, %p78
      %p81 = scmp.ne.s32.totalorder %s64, %s80
      %p82 = scmp.eq.s32.totalorder %s30, 0
      %p83 = por %p81, %p82
      %s85 = sadd.s32 %s84, 1
      %p88 = scmp.eq.s32.totalorder %s24, 3
      %p89 = scmp.ne.s32.totalorder %s84, %s86
      %p90 = scmp.eq.s32.totalorder %s24, 0
      %p91 = por %p89, %p90
      %p92 = scmp.ne.s32.totalorder %s84, %s86
      %p93 = scmp.eq.s32.totalorder %s29, 3
      %p94 = por %p92, %p93
      %p95 = scmp.ne.s32.totalorder %s86, %s87
      %p96 = scmp.eq.s32.totalorder %s29, 0
      %p97 = por %p95, %p96
      %p98 = scmp.ne.s32.totalorder %s86, %s87
      %p99 = scmp.eq.s32.totalorder %s30, 3
      %p100 = por %p98, %p99
      %p102 = scmp.ne.s32.totalorder %s87, %s101
      %p103 = scmp.eq.s32.totalorder %s30, 0
      %p104 = por %p102, %p103
      %s106 = sadd.s32 %s105, 1
      %p109 = scmp.eq.s32.totalorder %s24, 3
      %p110 = scmp.ne.s32.totalorder %s105, %s107
      %p111 = scmp.eq.s32.totalorder %s24, 0
      %p112 = por %p110, %p111
      %p113 = scmp.ne.s32.totalorder %s105, %s107
      %p114 = scmp.eq.s32.totalorder %s29, 3
      %p115 = por %p113, %p114
      %p116 = scmp.ne.s32.totalorder %s107, %s108
      %p117 = scmp.eq.s32.totalorder %s29, 0
      %p118 = por %p116, %p117
      %p119 = scmp.ne.s32.totalorder %s107, %s108
      %p120 = scmp.eq.s32.totalorder %s30, 3
      %p121 = por %p119, %p120
      %p123 = scmp.ne.s32.totalorder %s108, %s122
      %p124 = scmp.eq.s32.totalorder %s30, 0
      %p125 = por %p123, %p124
      %s127 = sadd.s32 %s126, 1
      %p130 = scmp.eq.s32.totalorder %s24, 3
      %p131 = scmp.ne.s32.totalorder %s126, %s128
      %p132 = scmp.eq.s32.totalorder %s24, 0
      %p133 = por %p131, %p132
      %p134 = scmp.ne.s32.totalorder %s126, %s128
      %p135 = scmp.eq.s32.totalorder %s29, 3
      %p136 = por %p134, %p135
      %p137 = scmp.ne.s32.totalorder %s128, %s129
      %p138 = scmp.eq.s32.totalorder %s29, 0
      %p139 = por %p137, %p138
      %p140 = scmp.ne.s32.totalorder %s128, %s129
      %p141 = scmp.eq.s32.totalorder %s30, 3
      %p142 = por %p140, %p141
      %p144 = scmp.ne.s32.totalorder %s129, %s143
      %p145 = scmp.eq.s32.totalorder %s30, 0
      %p146 = por %p144, %p145
      %s148 = sadd.s32 %s147, 1
      %p151 = scmp.eq.s32.totalorder %s24, 3
      %p152 = scmp.ne.s32.totalorder %s147, %s149
      %p153 = scmp.eq.s32.totalorder %s24, 0
      %p154 = por %p152, %p153
      %p155 = scmp.ne.s32.totalorder %s147, %s149
      %p156 = scmp.eq.s32.totalorder %s29, 3
      %p157 = por %p155, %p156
      %p158 = scmp.ne.s32.totalorder %s149, %s150
      %p159 = scmp.eq.s32.totalorder %s29, 0
      %p160 = por %p158, %p159
      %p161 = scmp.ne.s32.totalorder %s149, %s150
      %p162 = scmp.eq.s32.totalorder %s30, 3
      %p163 = por %p161, %p162
      %p165 = scmp.ne.s32.totalorder %s150, %s164
      %p166 = scmp.eq.s32.totalorder %s30, 0
      %p167 = por %p165, %p166
      %s169 = sadd.s32 %s168, 1
      %p172 = scmp.eq.s32.totalorder %s24, 3
      %p173 = scmp.ne.s32.totalorder %s168, %s170
      %p174 = scmp.eq.s32.totalorder %s24, 0
      %p175 = por %p173, %p174
      %p176 = scmp.ne.s32.totalorder %s168, %s170
      %p177 = scmp.eq.s32.totalorder %s29, 3
      %p178 = por %p176, %p177
      %p179 = scmp.ne.s32.totalorder %s170, %s171
      %p180 = scmp.eq.s32.totalorder %s29, 0
      %p181 = por %p179, %p180
      %p182 = scmp.ne.s32.totalorder %s170, %s171
      %p183 = scmp.eq.s32.totalorder %s30, 3
      %p184 = por %p182, %p183
      %p186 = scmp.ne.s32.totalorder %s171, %s185
      %p187 = scmp.eq.s32.totalorder %s30, 0
      %p188 = por %p186, %p187
      %s190 = sadd.s32 %s189, 1
      %p193 = scmp.eq.s32.totalorder %s24, 3
      %p194 = scmp.ne.s32.totalorder %s189, %s191
      %p195 = scmp.eq.s32.totalorder %s24, 0
      %p196 = por %p194, %p195
      %p197 = scmp.ne.s32.totalorder %s189, %s191
      %p198 = scmp.eq.s32.totalorder %s29, 3
      %p199 = por %p197, %p198
      %p200 = scmp.ne.s32.totalorder %s191, %s192
      %p201 = scmp.eq.s32.totalorder %s29, 0
      %p202 = por %p200, %p201
      %p203 = scmp.ne.s32.totalorder %s191, %s192
      %p204 = scmp.eq.s32.totalorder %s30, 3
      %p205 = por %p203, %p204
      %p207 = scmp.ne.s32.totalorder %s192, %s206
      %p208 = scmp.eq.s32.totalorder %s30, 0
      %p209 = por %p207, %p208
      %s211 = sadd.s32 %s210, 1
      %p214 = scmp.eq.s32.totalorder %s24, 3
      %p215 = scmp.ne.s32.totalorder %s210, %s212
      %p216 = scmp.eq.s32.totalorder %s24, 0
      %p217 = por %p215, %p216
      %p218 = scmp.ne.s32.totalorder %s210, %s212
      %p219 = scmp.eq.s32.totalorder %s29, 3
      %p220 = por %p218, %p219
      %p221 = scmp.ne.s32.totalorder %s212, %s213
      %p222 = scmp.eq.s32.totalorder %s29, 0
      %p223 = por %p221, %p222
      %p224 = scmp.ne.s32.totalorder %s212, %s213
      %p225 = scmp.eq.s32.totalorder %s30, 3
      %p226 = por %p224, %p225
      %p228 = scmp.ne.s32.totalorder %s213, %s227
      %p229 = scmp.eq.s32.totalorder %s30, 0
      %p230 = por %p228, %p229
      %s232 = sadd.s32 %s231, 1
      %p235 = scmp.eq.s32.totalorder %s24, 3
      %p236 = scmp.ne.s32.totalorder %s231, %s233
      %p237 = scmp.eq.s32.totalorder %s24, 0
      %p238 = por %p236, %p237
      %p239 = scmp.ne.s32.totalorder %s231, %s233
      %p240 = scmp.eq.s32.totalorder %s29, 3
      %p241 = por %p239, %p240
      %p242 = scmp.ne.s32.totalorder %s233, %s234
      %p243 = scmp.eq.s32.totalorder %s29, 0
      %p244 = por %p242, %p243
      %p245 = scmp.ne.s32.totalorder %s233, %s234
      %p246 = scmp.eq.s32.totalorder %s30, 3
      %p247 = por %p245, %p246
      %p249 = scmp.ne.s32.totalorder %s234, %s248
      %p250 = scmp.eq.s32.totalorder %s30, 0
      %p251 = por %p249, %p250
      %s253 = sadd.s32 %s252, 1
      %p256 = scmp.eq.s32.totalorder %s24, 3
      %p257 = scmp.ne.s32.totalorder %s252, %s254
      %p258 = scmp.eq.s32.totalorder %s24, 0
      %p259 = por %p257, %p258
      %p260 = scmp.ne.s32.totalorder %s252, %s254
      %p261 = scmp.eq.s32.totalorder %s29, 3
      %p262 = por %p260, %p261
      %p263 = scmp.ne.s32.totalorder %s254, %s255
      %p264 = scmp.eq.s32.totalorder %s29, 0
      %p265 = por %p263, %p264
      %p266 = scmp.ne.s32.totalorder %s254, %s255
      %p267 = scmp.eq.s32.totalorder %s30, 3
      %p268 = por %p266, %p267
      %p270 = scmp.ne.s32.totalorder %s255, %s269
      %p271 = scmp.eq.s32.totalorder %s30, 0
      %p272 = por %p270, %p271
      %s274 = sadd.s32 %s273, 1
      %p277 = scmp.eq.s32.totalorder %s24, 3
      %p278 = scmp.ne.s32.totalorder %s273, %s275
      %p279 = scmp.eq.s32.totalorder %s24, 0
      %p280 = por %p278, %p279
      %p281 = scmp.ne.s32.totalorder %s273, %s275
      %p282 = scmp.eq.s32.totalorder %s29, 3
      %p283 = por %p281, %p282
      %p284 = scmp.ne.s32.totalorder %s275, %s276
      %p285 = scmp.eq.s32.totalorder %s29, 0
      %p286 = por %p284, %p285
      %p287 = scmp.ne.s32.totalorder %s275, %s276
      %p288 = scmp.eq.s32.totalorder %s30, 3
      %p289 = por %p287, %p288
      %p291 = scmp.ne.s32.totalorder %s276, %s290
      %p292 = scmp.eq.s32.totalorder %s30, 0
      %p293 = por %p291, %p292
      %s294 = ssub.s32 %s24, %s31
      %p295 = scmp.eq.s32.totalorder %s294, 0
      %s297 = sadd.s32 %s296, 1
      %s298 = scalar_select %p295, %s296, %s297
      %p301 = pneg %p295
      %p302 = scmp.eq.s32.totalorder %s24, 3
      %p303 = por %p301, %p302
      %p304 = scmp.ne.s32.totalorder %s296, %s299
      %p305 = scmp.eq.s32.totalorder %s24, 0
      %p306 = por %p304, %p305
      %p307 = scmp.ne.s32.totalorder %s296, %s299
      %p308 = scmp.eq.s32.totalorder %s29, 3
      %p309 = por %p307, %p308
      %p310 = scmp.ne.s32.totalorder %s299, %s300
      %p311 = scmp.eq.s32.totalorder %s29, 0
      %p312 = por %p310, %p311
      %p313 = scmp.ne.s32.totalorder %s299, %s300
      %p314 = scmp.eq.s32.totalorder %s30, 3
      %p315 = por %p313, %p314
      %p317 = scmp.ne.s32.totalorder %s300, %s316
      %p318 = scmp.eq.s32.totalorder %s30, 0
      %p319 = por %p317, %p318
      %p320 = scmp.le.s32.totalorder 1, %s24
      %p321 = scmp.lt.s32.totalorder %s24, 5
      %p322 = pnand %p320, %p321
      %p323 = pneg %p322
      // Predicated region
      $region9: #{tpu_custom_call.1} parent=5 // pred_check
        _
      $region10: #{tpu_custom_call.1} parent=5 // pred_check_branch
        %325 = sbr.rel (%p322) target = $region12
      $region11: #{tpu_custom_call.1} parent=5 // pred_region
        %s326 = ssub.s32 %s24, 1
        // Predicated region
        $region13: #{tpu_custom_call.1} parent=11 // pred_check
          %p327 = pneg %p97
        $region14: #{tpu_custom_call.1} parent=11 // pred_check_branch
          %329 = sbr.rel (%p327) target = $region16
        $region15: #{tpu_custom_call.1} parent=11 // pred_region
          _
        $region16: #{tpu_custom_call.1} parent=11 // pred_fallthru
          _
        // Predicated region
        $region17: #{tpu_custom_call.1} parent=11 // pred_check
          %p330 = pneg %p118
        $region18: #{tpu_custom_call.1} parent=11 // pred_check_branch
          %332 = sbr.rel (%p330) target = $region20
        $region19: #{tpu_custom_call.1} parent=11 // pred_region
          _
        $region20: #{tpu_custom_call.1} parent=11 // pred_fallthru
          _
        // Predicated region
        $region21: #{tpu_custom_call.1} parent=11 // pred_check
          %p333 = pneg %p139
        $region22: #{tpu_custom_call.1} parent=11 // pred_check_branch
          %335 = sbr.rel (%p333) target = $region24
        $region23: #{tpu_custom_call.1} parent=11 // pred_region
          %s337 = ssub.s32 4096, 4096
          %338 = vsyncadd [#allocation4], %s337
          %s339 = sshll.u32 [#allocation3], 4
          %s340 = int_to_ptr.vmem [resolvable:$true] %s339
          %345 = dma.hbm_to_vmem [thread:$0]  %s4, 4096, %s340, [#allocation4], 256, 256, 16
        $region24: #{tpu_custom_call.1} parent=11 // pred_fallthru
          _
        // Predicated region
        $region25: #{tpu_custom_call.1} parent=11 // pred_check
          %p346 = pneg %p160
        $region26: #{tpu_custom_call.1} parent=11 // pred_check_branch
          %348 = sbr.rel (%p346) target = $region28
        $region27: #{tpu_custom_call.1} parent=11 // pred_region
          %s350 = ssub.s32 1024, 1024
          %351 = vsyncadd [#allocation7], %s350
          %s352 = sshll.u32 [#allocation6], 4
          %s353 = int_to_ptr.vmem [resolvable:$true] %s352
          %358 = dma.hbm_to_vmem [thread:$0]  %s5, 1024, %s353, [#allocation7], 256, 256, 16
        $region28: #{tpu_custom_call.1} parent=11 // pred_fallthru
          _
        // Predicated region
        $region29: #{tpu_custom_call.1} parent=11 // pred_check
          %p359 = pneg %p181
        $region30: #{tpu_custom_call.1} parent=11 // pred_check_branch
          %361 = sbr.rel (%p359) target = $region32
        $region31: #{tpu_custom_call.1} parent=11 // pred_region
          _
        $region32: #{tpu_custom_call.1} parent=11 // pred_fallthru
          _
        // Predicated region
        $region33: #{tpu_custom_call.1} parent=11 // pred_check
          %p362 = pneg %p202
        $region34: #{tpu_custom_call.1} parent=11 // pred_check_branch
          %364 = sbr.rel (%p362) target = $region36
        $region35: #{tpu_custom_call.1} parent=11 // pred_region
          _
        $region36: #{tpu_custom_call.1} parent=11 // pred_fallthru
          _
        // Predicated region
        $region37: #{tpu_custom_call.1} parent=11 // pred_check
          %p365 = pneg %p223
        $region38: #{tpu_custom_call.1} parent=11 // pred_check_branch
          %367 = sbr.rel (%p365) target = $region40
        $region39: #{tpu_custom_call.1} parent=11 // pred_region
          _
        $region40: #{tpu_custom_call.1} parent=11 // pred_fallthru
          _
        // Predicated region
        $region41: #{tpu_custom_call.1} parent=11 // pred_check
          %p368 = pneg %p244
        $region42: #{tpu_custom_call.1} parent=11 // pred_check_branch
          %370 = sbr.rel (%p368) target = $region44
        $region43: #{tpu_custom_call.1} parent=11 // pred_region
          %s372 = ssub.s32 4096, 4096
          %373 = vsyncadd [#allocation7], %s372
          %s374 = sshll.u32 [#allocation8], 4
          %s375 = int_to_ptr.vmem [resolvable:$true] %s374
          %380 = dma.hbm_to_vmem [thread:$0]  %s9, 4096, %s375, [#allocation7], 64, 64, 4
        $region44: #{tpu_custom_call.1} parent=11 // pred_fallthru
          _
        // Predicated region
        $region45: #{tpu_custom_call.1} parent=11 // pred_check
          %p381 = pneg %p265
        $region46: #{tpu_custom_call.1} parent=11 // pred_check_branch
          %383 = sbr.rel (%p381) target = $region48
        $region47: #{tpu_custom_call.1} parent=11 // pred_region
          _
        $region48: #{tpu_custom_call.1} parent=11 // pred_fallthru
          _
        // Predicated region
        $region49: #{tpu_custom_call.1} parent=11 // pred_check
          %p384 = pneg %p286
        $region50: #{tpu_custom_call.1} parent=11 // pred_check_branch
          %386 = sbr.rel (%p384) target = $region52
        $region51: #{tpu_custom_call.1} parent=11 // pred_region
          _
        $region52: #{tpu_custom_call.1} parent=11 // pred_fallthru
          _
      $region12: #{tpu_custom_call.1} parent=5 // pred_fallthru
        _
      %p387 = scmp.lt.s32.totalorder %s24, 4
      // Predicated region
      $region53: #{tpu_custom_call.1} parent=5 // pred_check
        %p388 = pneg %p387
      $region54: #{tpu_custom_call.1} parent=5 // pred_check_branch
        %390 = sbr.rel (%p388) target = $region56
      $region55: #{tpu_custom_call.1} parent=5 // pred_region
        // Predicated region
        $region57: #{tpu_custom_call.1} parent=55 // pred_check
          %p391 = pneg %p44
        $region58: #{tpu_custom_call.1} parent=55 // pred_check_branch
          %393 = sbr.rel (%p391) target = $region60
        $region59: #{tpu_custom_call.1} parent=55 // pred_region
          %s394 = smul.u32 2, %s24
          %p395 = scmp.lt.s32.totalorder %s394, 7
          %s396 = scalar_select %p395, %s394, 7
          %s397 = smul.addr %s396, 8
          %s398 = scalar_lea.vmem %s0, %s397
          %s399 = smul.u32 2, %s24
        $region60: #{tpu_custom_call.1} parent=55 // pred_fallthru
          _
        // Predicated region
        $region61: #{tpu_custom_call.1} parent=55 // pred_check
          %p400 = pneg %p70
        $region62: #{tpu_custom_call.1} parent=55 // pred_check_branch
          %402 = sbr.rel (%p400) target = $region64
        $region63: #{tpu_custom_call.1} parent=55 // pred_region
          %s403 = smul.u32 2, %s24
          %p404 = scmp.lt.s32.totalorder %s403, 7
          %s405 = scalar_select %p404, %s403, 7
          %s406 = smul.addr %s405, 8
          %s407 = scalar_lea.vmem %s1, %s406
          %s408 = smul.u32 2, %s24
        $region64: #{tpu_custom_call.1} parent=55 // pred_fallthru
          _
      $region56: #{tpu_custom_call.1} parent=5 // pred_fallthru
        _
      %p409 = scmp.le.s32.totalorder 1, %s24
      %p410 = scmp.lt.s32.totalorder %s24, 5
      %p411 = pnand %p409, %p410
      %p412 = pneg %p411
      // Predicated region
      $region65: #{tpu_custom_call.1} parent=5 // pred_check
        _
      $region66: #{tpu_custom_call.1} parent=5 // pred_check_branch
        %414 = sbr.rel (%p411) target = $region68
      $region67: #{tpu_custom_call.1} parent=5 // pred_region
        %s415 = ssub.s32 %s24, 1
        // Predicated region
        $region69: #{tpu_custom_call.1} parent=67 // pred_check
          %p416 = pneg %p139
        $region70: #{tpu_custom_call.1} parent=67 // pred_check_branch
          %418 = sbr.rel (%p416) target = $region72
        $region71: #{tpu_custom_call.1} parent=67 // pred_region
          %419 = dma.done [#allocation4], 4096
        $region72: #{tpu_custom_call.1} parent=67 // pred_fallthru
          _
        // Predicated region
        $region73: #{tpu_custom_call.1} parent=67 // pred_check
          %p420 = pneg %p160
        $region74: #{tpu_custom_call.1} parent=67 // pred_check_branch
          %422 = sbr.rel (%p420) target = $region76
        $region75: #{tpu_custom_call.1} parent=67 // pred_region
          %423 = dma.done [#allocation7], 1024
        $region76: #{tpu_custom_call.1} parent=67 // pred_fallthru
          _
        // Predicated region
        $region77: #{tpu_custom_call.1} parent=67 // pred_check
          %p424 = pneg %p244
        $region78: #{tpu_custom_call.1} parent=67 // pred_check_branch
          %426 = sbr.rel (%p424) target = $region80
        $region79: #{tpu_custom_call.1} parent=67 // pred_region
          %427 = dma.done [#allocation7], 4096
        $region80: #{tpu_custom_call.1} parent=67 // pred_fallthru
          _
        %s428 = smul.u32 2, %s29
        %p429 = scmp.lt.s32.totalorder %s428, 7
        %s430 = scalar_select %p429, %s428, 7
        %s431 = smul.addr %s430, 8
        %s432 = scalar_lea.vmem %s0, %s431
        %p433 = pneg %p50
        %p434 = pneg %p47
        %s435 = smul.u32 2, %s29
        %p436 = scmp.lt.s32.totalorder %s435, 7
        %s437 = scalar_select %p436, %s435, 7
        %s438 = smul.addr %s437, 8
        %s439 = scalar_lea.vmem %s1, %s438
        %p440 = pneg %p76
        %p441 = pneg %p73
        %p442 = pneg %p97
        %p443 = pneg %p94
        %p444 = pneg %p118
        %p445 = pneg %p115
        %p446 = pneg %p139
        %p447 = pneg %p136
        %p448 = pneg %p160
        %p449 = pneg %p157
        %p450 = pneg %p181
        %p451 = pneg %p178
        %p452 = pneg %p202
        %p453 = pneg %p199
        %p454 = pneg %p223
        %p455 = pneg %p220
        %p456 = pneg %p244
        %p457 = pneg %p241
        %p458 = pneg %p265
        %p459 = pneg %p262
        %p460 = pneg %p286
        %p461 = pneg %p283
        %p462 = pneg %p312
        %p463 = pneg %p309
        %s464 = sand.u32 %s299, 1
        %s465 = scalar_lea.sflag [#allocation5], %s464
        %s466 = sand.u32 %s299, 1
        %s467 = smul.addr %s466, 16
        %s468 = scalar_lea.vmem [#allocation9], %s467
        %s469 = smul.u32 2, %s29
        %p470 = scmp.lt.s32.totalorder %s469, 7
        %s471 = scalar_select %p470, %s469, 7
        %s472 = smul.addr %s471, 8
        %s473 = scalar_lea.vmem %s0, %s472
        %s474 = smul.u32 2, %s29
        %s475 = smul.u32 2, %s29
        %p476 = scmp.lt.s32.totalorder %s475, 7
        %s477 = scalar_select %p476, %s475, 7
        %s478 = smul.addr %s477, 8
        %s479 = scalar_lea.vmem %s1, %s478
        %s480 = smul.u32 2, %s29
        %s481 = smul.u32 2, %s29
        %v483 = vld [vmem:[%s473] sm:$0xff]
        %v484 = vld [vmem:[%s473 + $0x8] sm:$0xff]
        %485 = vadd.xlane.f32.xlu0 %v483
        %v486 = vpop.xlane.xlu0 %485
        %487 = vadd.xlane.f32.xlu0 %v484
        %v488 = vpop.xlane.xlu0 %487
        %v489 = vrcp.pop 128.0
        %v490 = vmul.f32 %v486, %v489
        %v491 = vmul.f32 %v488, %v489
        %v492 = vsub.f32 %v483, %v490
        %v493 = vsub.f32 %v484, %v491
        %v494 = vmul.f32 %v492, %v492
        %v495 = vmul.f32 %v493, %v493
        %496 = vadd.xlane.f32.xlu0 %v494
        %v497 = vpop.xlane.xlu0 %496
        %498 = vadd.xlane.f32.xlu0 %v495
        %v499 = vpop.xlane.xlu0 %498
        %v500 = vmul.f32 %v497, %v489
        %v501 = vmul.f32 %v499, %v489
        %v502 = vadd.f32 %v500, 1e-05
        %v503 = vadd.f32 %v501, 1e-05
        %v504 = vrsqrt.pop %v502
        %v505 = vrsqrt.pop %v503
        %v506 = vmul.f32 %v492, %v504
        %v507 = vmul.f32 %v493, %v505
        %v508 = vld [vmem:[%s2] sm:$0x1]
        %v510 = vlaneseq
        %v511 = vshrl.u32 %v510, 7
        %v512 = vsub.s32 0, %v511
        %v513 = vrot.slane %v508, %v512
        %v515 = vmul.f32 %v506, %v513
        %v516 = vmul.f32 %v507, %v513
        %v517 = vld [vmem:[%s3] sm:$0x1]
        %v519 = vlaneseq
        %v520 = vshrl.u32 %v519, 7
        %v521 = vsub.s32 0, %v520
        %v522 = vrot.slane %v517, %v521
        %v524 = vadd.f32 %v515, %v522
        %v525 = vadd.f32 %v516, %v522
        %v526 = vpack.c.bf16 %v525, %v524
        %v527 = vld [vmem:[#allocation3] sm:$0xff]
        %v528 = vld [vmem:[#allocation3 + $0x8] sm:$0xff]
        %v529 = vld [vmem:[#allocation3 + $0x10] sm:$0xff]
        %v530 = vld [vmem:[#allocation3 + $0x18] sm:$0xff]
        %v531 = vld [vmem:[#allocation3 + $0x20] sm:$0xff]
        %v532 = vld [vmem:[#allocation3 + $0x28] sm:$0xff]
        %v533 = vld [vmem:[#allocation3 + $0x30] sm:$0xff]
        %v534 = vld [vmem:[#allocation3 + $0x38] sm:$0xff]
        %v535 = vld [vmem:[#allocation3 + $0x40] sm:$0xff]
        %v536 = vld [vmem:[#allocation3 + $0x48] sm:$0xff]
        %v537 = vld [vmem:[#allocation3 + $0x50] sm:$0xff]
        %v538 = vld [vmem:[#allocation3 + $0x58] sm:$0xff]
        %v539 = vld [vmem:[#allocation3 + $0x60] sm:$0xff]
        %v540 = vld [vmem:[#allocation3 + $0x68] sm:$0xff]
        %v541 = vld [vmem:[#allocation3 + $0x70] sm:$0xff]
        %v542 = vld [vmem:[#allocation3 + $0x78] sm:$0xff]
        %v543 = vld [vmem:[#allocation3 + $0x80] sm:$0xff]
        %v544 = vld [vmem:[#allocation3 + $0x88] sm:$0xff]
        %v545 = vld [vmem:[#allocation3 + $0x90] sm:$0xff]
        %v546 = vld [vmem:[#allocation3 + $0x98] sm:$0xff]
        %v547 = vld [vmem:[#allocation3 + $0xa0] sm:$0xff]
        %v548 = vld [vmem:[#allocation3 + $0xa8] sm:$0xff]
        %v549 = vld [vmem:[#allocation3 + $0xb0] sm:$0xff]
        %v550 = vld [vmem:[#allocation3 + $0xb8] sm:$0xff]
        %v551 = vld [vmem:[#allocation3 + $0xc0] sm:$0xff]
        %v552 = vld [vmem:[#allocation3 + $0xc8] sm:$0xff]
        %v553 = vld [vmem:[#allocation3 + $0xd0] sm:$0xff]
        %v554 = vld [vmem:[#allocation3 + $0xd8] sm:$0xff]
        %v555 = vld [vmem:[#allocation3 + $0xe0] sm:$0xff]
        %v556 = vld [vmem:[#allocation3 + $0xe8] sm:$0xff]
        %v557 = vld [vmem:[#allocation3 + $0xf0] sm:$0xff]
        %v558 = vld [vmem:[#allocation3 + $0xf8] sm:$0xff]
        %v559 = vld [vmem:[%s479] sm:$0xff]
        %v560 = vld [vmem:[%s479 + $0x8] sm:$0xff]
        %v561 = vpack.c.bf16 %v560, %v559
        %v562 = vld [vmem:[#allocation6] sm:$0xff]
        %v563 = vld [vmem:[#allocation6 + $0x8] sm:$0xff]
        %v564 = vld [vmem:[#allocation6 + $0x10] sm:$0xff]
        %v565 = vld [vmem:[#allocation6 + $0x18] sm:$0xff]
        %v566 = vld [vmem:[#allocation6 + $0x20] sm:$0xff]
        %v567 = vld [vmem:[#allocation6 + $0x28] sm:$0xff]
        %v568 = vld [vmem:[#allocation6 + $0x30] sm:$0xff]
        %v569 = vld [vmem:[#allocation6 + $0x38] sm:$0xff]
        %v578 = vunpack.c.l.b16 %v562
        %v579 = vunpack.c.h.b16 %v562
        %v580 = vunpack.c.l.b16 %v563
        %v581 = vunpack.c.h.b16 %v563
        %v582 = vunpack.c.l.b16 %v564
        %v583 = vunpack.c.h.b16 %v564
        %v584 = vunpack.c.l.b16 %v565
        %v585 = vunpack.c.h.b16 %v565
        %v586 = vunpack.c.l.b16 %v566
        %v587 = vunpack.c.h.b16 %v566
        %v588 = vunpack.c.l.b16 %v567
        %v589 = vunpack.c.h.b16 %v567
        %v590 = vunpack.c.l.b16 %v568
        %v591 = vunpack.c.h.b16 %v568
        %v592 = vunpack.c.l.b16 %v569
        %v593 = vunpack.c.h.b16 %v569
        %v594 = vpack.c.b16 %v582, %v578
        %v595 = vpack.c.b16 %v583, %v579
        %v596 = vpack.c.b16 %v584, %v580
        %v597 = vpack.c.b16 %v585, %v581
        %v598 = vpack.c.b16 %v590, %v586
        %v599 = vpack.c.b16 %v591, %v587
        %v600 = vpack.c.b16 %v592, %v588
        %v601 = vpack.c.b16 %v593, %v589
        %vm610 = vcmask 261120
        %v612 = vsel %vm610, %v561, 0
        %614 = vmatprep.subr.bf16.mxu0 %v595
        %615 = vmatpush1.bf16.msra.mxu0 %v594
        %616 = vmatprep.subr.bf16.mxu0 %v599
        %617 = vmatpush1.bf16.msra.mxu0 %v598
        %618 = vmatprep.subr.bf16.mxu0 0
        %619 = vmatpush1.bf16.msra.mxu0 0
        %620 = vmatprep.subr.bf16.mxu0 0
        %621 = vmatpush1.bf16.msra.mxu0 0
        %622 = vmatprep.subr.bf16.mxu0 0
        %623 = vmatpush1.bf16.msra.mxu0 0
        %624 = vmatprep.subr.bf16.mxu0 0
        %625 = vmatpush1.bf16.msra.mxu0 0
        %626 = vmatprep.subr.bf16.mxu0 0
        %627 = vmatpush1.bf16.msra.mxu0 0
        %628 = vmatprep.subr.bf16.mxu0 0
        %629 = vmatpush1.bf16.msra.mxu0 0
        %630 = vmatprep.subr.bf16.mxu0 0
        %631 = vmatpush1.bf16.msra.mxu0 0
        %632 = vmatprep.subr.bf16.mxu0 0
        %633 = vmatpush1.bf16.msra.mxu0 0
        %634 = vmatprep.subr.bf16.mxu0 0
        %635 = vmatpush1.bf16.msra.mxu0 0
        %636 = vmatprep.subr.bf16.mxu0 0
        %637 = vmatpush1.bf16.msra.mxu0 0
        %638 = vmatprep.subr.bf16.mxu0 0
        %639 = vmatpush1.bf16.msra.mxu0 0
        %640 = vmatprep.subr.bf16.mxu0 0
        %641 = vmatpush1.bf16.msra.mxu0 0
        %642 = vmatprep.subr.bf16.mxu0 0
        %643 = vmatpush1.bf16.msra.mxu0 0
        %644 = vmatprep.subr.bf16.mxu0 0
        %645 = vmatpush1.bf16.msra.mxu0 0
        %646 = vmatprep.mubr.bf16.mxu0 0
        %647 = vmatmul.mubr.bf16.gmra.mrb[0].mxu0 %v612
        %v648 = vpop.f32.mrb[0].mxu0
        %v649 = vadd.f32 0.0, %v648
        %v650 = vpop.f32.mrb[0].mxu0
        %v651 = vadd.f32 0.0, %v650
        %v652 = vpop.f32.mrb[0].mxu0
        %v653 = vadd.f32 0.0, %v652
        %v654 = vpop.f32.mrb[0].mxu0
        %v655 = vadd.f32 0.0, %v654
        %656 = vdwg.mxu0
        %657 = vmatprep.subr.bf16.mxu0 %v597
        %658 = vmatpush1.bf16.msra.mxu0 %v596
        %659 = vmatprep.subr.bf16.mxu0 %v601
        %660 = vmatpush1.bf16.msra.mxu0 %v600
        %661 = vmatprep.subr.bf16.mxu0 0
        %662 = vmatpush1.bf16.msra.mxu0 0
        %663 = vmatprep.subr.bf16.mxu0 0
        %664 = vmatpush1.bf16.msra.mxu0 0
        %665 = vmatprep.subr.bf16.mxu0 0
        %666 = vmatpush1.bf16.msra.mxu0 0
        %667 = vmatprep.subr.bf16.mxu0 0
        %668 = vmatpush1.bf16.msra.mxu0 0
        %669 = vmatprep.subr.bf16.mxu0 0
        %670 = vmatpush1.bf16.msra.mxu0 0
        %671 = vmatprep.subr.bf16.mxu0 0
        %672 = vmatpush1.bf16.msra.mxu0 0
        %673 = vmatprep.subr.bf16.mxu0 0
        %674 = vmatpush1.bf16.msra.mxu0 0
        %675 = vmatprep.subr.bf16.mxu0 0
        %676 = vmatpush1.bf16.msra.mxu0 0
        %677 = vmatprep.subr.bf16.mxu0 0
        %678 = vmatpush1.bf16.msra.mxu0 0
        %679 = vmatprep.subr.bf16.mxu0 0
        %680 = vmatpush1.bf16.msra.mxu0 0
        %681 = vmatprep.subr.bf16.mxu0 0
        %682 = vmatpush1.bf16.msra.mxu0 0
        %683 = vmatprep.subr.bf16.mxu0 0
        %684 = vmatpush1.bf16.msra.mxu0 0
        %685 = vmatprep.subr.bf16.mxu0 0
        %686 = vmatpush1.bf16.msra.mxu0 0
        %687 = vmatprep.subr.bf16.mxu0 0
        %688 = vmatpush1.bf16.msra.mxu0 0
        %689 = vmatprep.mubr.bf16.mxu0 0
        %690 = vmatmul.mubr.bf16.gmra.mrb[0].mxu0 %v612
        %v691 = vpop.f32.mrb[0].mxu0
        %v692 = vadd.f32 0.0, %v691
        %v693 = vpop.f32.mrb[0].mxu0
        %v694 = vadd.f32 0.0, %v693
        %v695 = vpop.f32.mrb[0].mxu0
        %v696 = vadd.f32 0.0, %v695
        %v697 = vpop.f32.mrb[0].mxu0
        %v698 = vadd.f32 0.0, %v697
        %699 = vdwg.mxu0
        %v732 = vunpack.c.l.b16 %v527
        %v733 = vunpack.c.h.b16 %v527
        %v734 = vunpack.c.l.b16 %v528
        %v735 = vunpack.c.h.b16 %v528
        %v736 = vunpack.c.l.b16 %v529
        %v737 = vunpack.c.h.b16 %v529
        %v738 = vunpack.c.l.b16 %v530
        %v739 = vunpack.c.h.b16 %v530
        %v740 = vunpack.c.l.b16 %v531
        %v741 = vunpack.c.h.b16 %v531
        %v742 = vunpack.c.l.b16 %v532
        %v743 = vunpack.c.h.b16 %v532
        %v744 = vunpack.c.l.b16 %v533
        %v745 = vunpack.c.h.b16 %v533
        %v746 = vunpack.c.l.b16 %v534
        %v747 = vunpack.c.h.b16 %v534
        %v748 = vunpack.c.l.b16 %v535
        %v749 = vunpack.c.h.b16 %v535
        %v750 = vunpack.c.l.b16 %v536
        %v751 = vunpack.c.h.b16 %v536
        %v752 = vunpack.c.l.b16 %v537
        %v753 = vunpack.c.h.b16 %v537
        %v754 = vunpack.c.l.b16 %v538
        %v755 = vunpack.c.h.b16 %v538
        %v756 = vunpack.c.l.b16 %v539
        %v757 = vunpack.c.h.b16 %v539
        %v758 = vunpack.c.l.b16 %v540
        %v759 = vunpack.c.h.b16 %v540
        %v760 = vunpack.c.l.b16 %v541
        %v761 = vunpack.c.h.b16 %v541
        %v762 = vunpack.c.l.b16 %v542
        %v763 = vunpack.c.h.b16 %v542
        %v764 = vunpack.c.l.b16 %v543
        %v765 = vunpack.c.h.b16 %v543
        %v766 = vunpack.c.l.b16 %v544
        %v767 = vunpack.c.h.b16 %v544
        %v768 = vunpack.c.l.b16 %v545
        %v769 = vunpack.c.h.b16 %v545
        %v770 = vunpack.c.l.b16 %v546
        %v771 = vunpack.c.h.b16 %v546
        %v772 = vunpack.c.l.b16 %v547
        %v773 = vunpack.c.h.b16 %v547
        %v774 = vunpack.c.l.b16 %v548
        %v775 = vunpack.c.h.b16 %v548
        %v776 = vunpack.c.l.b16 %v549
        %v777 = vunpack.c.h.b16 %v549
        %v778 = vunpack.c.l.b16 %v550
        %v779 = vunpack.c.h.b16 %v550
        %v780 = vunpack.c.l.b16 %v551
        %v781 = vunpack.c.h.b16 %v551
        %v782 = vunpack.c.l.b16 %v552
        %v783 = vunpack.c.h.b16 %v552
        %v784 = vunpack.c.l.b16 %v553
        %v785 = vunpack.c.h.b16 %v553
        %v786 = vunpack.c.l.b16 %v554
        %v787 = vunpack.c.h.b16 %v554
        %v788 = vunpack.c.l.b16 %v555
        %v789 = vunpack.c.h.b16 %v555
        %v790 = vunpack.c.l.b16 %v556
        %v791 = vunpack.c.h.b16 %v556
        %v792 = vunpack.c.l.b16 %v557
        %v793 = vunpack.c.h.b16 %v557
        %v794 = vunpack.c.l.b16 %v558
        %v795 = vunpack.c.h.b16 %v558
        %v796 = vpack.c.b16 %v736, %v732
        %v797 = vpack.c.b16 %v737, %v733
        %v798 = vpack.c.b16 %v738, %v734
        %v799 = vpack.c.b16 %v739, %v735
        %v800 = vpack.c.b16 %v744, %v740
        %v801 = vpack.c.b16 %v745, %v741
        %v802 = vpack.c.b16 %v746, %v742
        %v803 = vpack.c.b16 %v747, %v743
        %v804 = vpack.c.b16 %v752, %v748
        %v805 = vpack.c.b16 %v753, %v749
        %v806 = vpack.c.b16 %v754, %v750
        %v807 = vpack.c.b16 %v755, %v751
        %v808 = vpack.c.b16 %v760, %v756
        %v809 = vpack.c.b16 %v761, %v757
        %v810 = vpack.c.b16 %v762, %v758
        %v811 = vpack.c.b16 %v763, %v759
        %v812 = vpack.c.b16 %v768, %v764
        %v813 = vpack.c.b16 %v769, %v765
        %v814 = vpack.c.b16 %v770, %v766
        %v815 = vpack.c.b16 %v771, %v767
        %v816 = vpack.c.b16 %v776, %v772
        %v817 = vpack.c.b16 %v777, %v773
        %v818 = vpack.c.b16 %v778, %v774
        %v819 = vpack.c.b16 %v779, %v775
        %v820 = vpack.c.b16 %v784, %v780
        %v821 = vpack.c.b16 %v785, %v781
        %v822 = vpack.c.b16 %v786, %v782
        %v823 = vpack.c.b16 %v787, %v783
        %v824 = vpack.c.b16 %v792, %v788
        %v825 = vpack.c.b16 %v793, %v789
        %v826 = vpack.c.b16 %v794, %v790
        %v827 = vpack.c.b16 %v795, %v791
        %860 = vmatprep.subr.bf16.mxu0 %v797
        %861 = vmatpush1.bf16.msra.mxu0 %v796
        %862 = vmatprep.subr.bf16.mxu0 %v801
        %863 = vmatpush1.bf16.msra.mxu0 %v800
        %864 = vmatprep.subr.bf16.mxu0 %v805
        %865 = vmatpush1.bf16.msra.mxu0 %v804
        %866 = vmatprep.subr.bf16.mxu0 %v809
        %867 = vmatpush1.bf16.msra.mxu0 %v808
        %868 = vmatprep.subr.bf16.mxu0 %v813
        %869 = vmatpush1.bf16.msra.mxu0 %v812
        %870 = vmatprep.subr.bf16.mxu0 %v817
        %871 = vmatpush1.bf16.msra.mxu0 %v816
        %872 = vmatprep.subr.bf16.mxu0 %v821
        %873 = vmatpush1.bf16.msra.mxu0 %v820
        %874 = vmatprep.subr.bf16.mxu0 %v825
        %875 = vmatpush1.bf16.msra.mxu0 %v824
        %876 = vmatprep.subr.bf16.mxu0 0
        %877 = vmatpush1.bf16.msra.mxu0 0
        %878 = vmatprep.subr.bf16.mxu0 0
        %879 = vmatpush1.bf16.msra.mxu0 0
        %880 = vmatprep.subr.bf16.mxu0 0
        %881 = vmatpush1.bf16.msra.mxu0 0
        %882 = vmatprep.subr.bf16.mxu0 0
        %883 = vmatpush1.bf16.msra.mxu0 0
        %884 = vmatprep.subr.bf16.mxu0 0
        %885 = vmatpush1.bf16.msra.mxu0 0
        %886 = vmatprep.subr.bf16.mxu0 0
        %887 = vmatpush1.bf16.msra.mxu0 0
        %888 = vmatprep.subr.bf16.mxu0 0
        %889 = vmatpush1.bf16.msra.mxu0 0
        %890 = vmatprep.subr.bf16.mxu0 0
        %891 = vmatpush1.bf16.msra.mxu0 0
        %892 = vmatprep.mubr.bf16.mxu0 0
        %893 = vmatmul.mubr.bf16.gmra.mrb[0].mxu0 %v526
        %v894 = vpop.f32.mrb[0].mxu0
        %v895 = vadd.f32 %v649, %v894
        %v896 = vpop.f32.mrb[0].mxu0
        %v897 = vadd.f32 %v651, %v896
        %v898 = vpop.f32.mrb[0].mxu0
        %v899 = vadd.f32 %v653, %v898
        %v900 = vpop.f32.mrb[0].mxu0
        %v901 = vadd.f32 %v655, %v900
        %902 = vdwg.mxu0
        %903 = vmatprep.subr.bf16.mxu0 %v799
        %904 = vmatpush1.bf16.msra.mxu0 %v798
        %905 = vmatprep.subr.bf16.mxu0 %v803
        %906 = vmatpush1.bf16.msra.mxu0 %v802
        %907 = vmatprep.subr.bf16.mxu0 %v807
        %908 = vmatpush1.bf16.msra.mxu0 %v806
        %909 = vmatprep.subr.bf16.mxu0 %v811
        %910 = vmatpush1.bf16.msra.mxu0 %v810
        %911 = vmatprep.subr.bf16.mxu0 %v815
        %912 = vmatpush1.bf16.msra.mxu0 %v814
        %913 = vmatprep.subr.bf16.mxu0 %v819
        %914 = vmatpush1.bf16.msra.mxu0 %v818
        %915 = vmatprep.subr.bf16.mxu0 %v823
        %916 = vmatpush1.bf16.msra.mxu0 %v822
        %917 = vmatprep.subr.bf16.mxu0 %v827
        %918 = vmatpush1.bf16.msra.mxu0 %v826
        %919 = vmatprep.subr.bf16.mxu0 0
        %920 = vmatpush1.bf16.msra.mxu0 0
        %921 = vmatprep.subr.bf16.mxu0 0
        %922 = vmatpush1.bf16.msra.mxu0 0
        %923 = vmatprep.subr.bf16.mxu0 0
        %924 = vmatpush1.bf16.msra.mxu0 0
        %925 = vmatprep.subr.bf16.mxu0 0
        %926 = vmatpush1.bf16.msra.mxu0 0
        %927 = vmatprep.subr.bf16.mxu0 0
        %928 = vmatpush1.bf16.msra.mxu0 0
        %929 = vmatprep.subr.bf16.mxu0 0
        %930 = vmatpush1.bf16.msra.mxu0 0
        %931 = vmatprep.subr.bf16.mxu0 0
        %932 = vmatpush1.bf16.msra.mxu0 0
        %933 = vmatprep.subr.bf16.mxu0 0
        %934 = vmatpush1.bf16.msra.mxu0 0
        %935 = vmatprep.mubr.bf16.mxu0 0
        %936 = vmatmul.mubr.bf16.gmra.mrb[0].mxu0 %v526
        %v937 = vpop.f32.mrb[0].mxu0
        %v938 = vadd.f32 %v692, %v937
        %v939 = vpop.f32.mrb[0].mxu0
        %v940 = vadd.f32 %v694, %v939
        %v941 = vpop.f32.mrb[0].mxu0
        %v942 = vadd.f32 %v696, %v941
        %v943 = vpop.f32.mrb[0].mxu0
        %v944 = vadd.f32 %v698, %v943
        %945 = vdwg.mxu0
        %v946 = vld [vmem:[%s6] sm:$0xf]
        %v948 = vlaneseq
        %v949 = vshrl.u32 %v948, 7
        %v950 = vsub.s32 0, %v949
        %v951 = vrot.slane %v946, %v950
        %v952 = vlaneseq
        %v953 = vshrl.u32 %v952, 7
        %v954 = vsub.s32 1, %v953
        %v955 = vrot.slane %v946, %v954
        %v956 = vlaneseq
        %v957 = vshrl.u32 %v956, 7
        %v958 = vsub.s32 2, %v957
        %v959 = vrot.slane %v946, %v958
        %v960 = vlaneseq
        %v961 = vshrl.u32 %v960, 7
        %v962 = vsub.s32 3, %v961
        %v963 = vrot.slane %v946, %v962
        %v968 = vadd.f32 %v895, %v951
        %v969 = vadd.f32 %v897, %v955
        %v970 = vadd.f32 %v938, %v959
        %v971 = vadd.f32 %v940, %v963
        %v972 = vadd.f32 %v899, %v951
        %v973 = vadd.f32 %v901, %v955
        %v974 = vadd.f32 %v942, %v959
        %v975 = vadd.f32 %v944, %v963
        %v976 = vcombine.low %v968, %v970
        %v977 = vcombine.high %v968, %v970
        %v979 = vunpack.c.l.s4 1983009808
        %v980 = vunpack.c.0.s8 %v979
        %v981 = vlaneseq
        %v982 = vshrl.u32 %v981, 7
        %v983 = vsub.s32 %v980, %v982
        %v984 = vrot.slane %v976, %v983
        %v986 = vunpack.c.l.s4 1983009808
        %v987 = vunpack.c.0.s8 %v986
        %v988 = vlaneseq
        %v989 = vshrl.u32 %v988, 7
        %v990 = vsub.s32 %v987, %v989
        %v991 = vrot.slane %v977, %v990
        %v992 = vcombine.low %v969, %v971
        %v993 = vcombine.high %v969, %v971
        %v995 = vunpack.c.l.s4 1983009808
        %v996 = vunpack.c.0.s8 %v995
        %v997 = vlaneseq
        %v998 = vshrl.u32 %v997, 7
        %v999 = vsub.s32 %v996, %v998
        %v1000 = vrot.slane %v992, %v999
        %v1002 = vunpack.c.l.s4 1983009808
        %v1003 = vunpack.c.0.s8 %v1002
        %v1004 = vlaneseq
        %v1005 = vshrl.u32 %v1004, 7
        %v1006 = vsub.s32 %v1003, %v1005
        %v1007 = vrot.slane %v993, %v1006
        %v1008 = vcombine.low %v984, %v1000
        %v1009 = vcombine.high %v984, %v1000
        %v1011 = vunpack.c.l.s4 1934713408
        %v1012 = vunpack.c.0.s8 %v1011
        %v1013 = vlaneseq
        %v1014 = vshrl.u32 %v1013, 7
        %v1015 = vsub.s32 %v1012, %v1014
        %v1016 = vrot.slane %v1008, %v1015
        %v1018 = vunpack.c.l.s4 1934713408
        %v1019 = vunpack.c.0.s8 %v1018
        %v1020 = vlaneseq
        %v1021 = vshrl.u32 %v1020, 7
        %v1022 = vsub.s32 %v1019, %v1021
        %v1023 = vrot.slane %v1009, %v1022
        %v1024 = vcombine.low %v991, %v1007
        %v1025 = vcombine.high %v991, %v1007
        %v1027 = vunpack.c.l.s4 1934713408
        %v1028 = vunpack.c.0.s8 %v1027
        %v1029 = vlaneseq
        %v1030 = vshrl.u32 %v1029, 7
        %v1031 = vsub.s32 %v1028, %v1030
        %v1032 = vrot.slane %v1024, %v1031
        %v1034 = vunpack.c.l.s4 1934713408
        %v1035 = vunpack.c.0.s8 %v1034
        %v1036 = vlaneseq
        %v1037 = vshrl.u32 %v1036, 7
        %v1038 = vsub.s32 %v1035, %v1037
        %v1039 = vrot.slane %v1025, %v1038
        %v1040 = vcombine.high %v1016, 0.0
        %v1041 = vcombine.high %v1023, 0.0
        %v1042 = vcombine.high %v1032, 0.0
        %v1043 = vcombine.high %v1039, 0.0
        %v1044 = vcombine.low %v972, %v974
        %v1045 = vcombine.high %v972, %v974
        %v1047 = vunpack.c.l.s4 1983009808
        %v1048 = vunpack.c.0.s8 %v1047
        %v1049 = vlaneseq
        %v1050 = vshrl.u32 %v1049, 7
        %v1051 = vsub.s32 %v1048, %v1050
        %v1052 = vrot.slane %v1044, %v1051
        %v1054 = vunpack.c.l.s4 1983009808
        %v1055 = vunpack.c.0.s8 %v1054
        %v1056 = vlaneseq
        %v1057 = vshrl.u32 %v1056, 7
        %v1058 = vsub.s32 %v1055, %v1057
        %v1059 = vrot.slane %v1045, %v1058
        %v1060 = vcombine.low %v973, %v975
        %v1061 = vcombine.high %v973, %v975
        %v1063 = vunpack.c.l.s4 1983009808
        %v1064 = vunpack.c.0.s8 %v1063
        %v1065 = vlaneseq
        %v1066 = vshrl.u32 %v1065, 7
        %v1067 = vsub.s32 %v1064, %v1066
        %v1068 = vrot.slane %v1060, %v1067
        %v1070 = vunpack.c.l.s4 1983009808
        %v1071 = vunpack.c.0.s8 %v1070
        %v1072 = vlaneseq
        %v1073 = vshrl.u32 %v1072, 7
        %v1074 = vsub.s32 %v1071, %v1073
        %v1075 = vrot.slane %v1061, %v1074
        %v1076 = vcombine.low %v1052, %v1068
        %v1077 = vcombine.high %v1052, %v1068
        %v1079 = vunpack.c.l.s4 1934713408
        %v1080 = vunpack.c.0.s8 %v1079
        %v1081 = vlaneseq
        %v1082 = vshrl.u32 %v1081, 7
        %v1083 = vsub.s32 %v1080, %v1082
        %v1084 = vrot.slane %v1076, %v1083
        %v1086 = vunpack.c.l.s4 1934713408
        %v1087 = vunpack.c.0.s8 %v1086
        %v1088 = vlaneseq
        %v1089 = vshrl.u32 %v1088, 7
        %v1090 = vsub.s32 %v1087, %v1089
        %v1091 = vrot.slane %v1077, %v1090
        %v1092 = vcombine.low %v1059, %v1075
        %v1093 = vcombine.high %v1059, %v1075
        %v1095 = vunpack.c.l.s4 1934713408
        %v1096 = vunpack.c.0.s8 %v1095
        %v1097 = vlaneseq
        %v1098 = vshrl.u32 %v1097, 7
        %v1099 = vsub.s32 %v1096, %v1098
        %v1100 = vrot.slane %v1092, %v1099
        %v1102 = vunpack.c.l.s4 1934713408
        %v1103 = vunpack.c.0.s8 %v1102
        %v1104 = vlaneseq
        %v1105 = vshrl.u32 %v1104, 7
        %v1106 = vsub.s32 %v1103, %v1105
        %v1107 = vrot.slane %v1093, %v1106
        %v1108 = vcombine.high %v1084, 0.0
        %v1109 = vcombine.high %v1091, 0.0
        %v1110 = vcombine.high %v1100, 0.0
        %v1111 = vcombine.high %v1107, 0.0
        %vm1112 = vcmask 1043456
        %v1113 = vsel %vm1112, %v1016, 0.0
        %1114 = vadd.xlane.f32.xlu0 %v1113
        %v1115 = vpop.xlane.xlu0 %1114
        %v1116 = vsel %vm1112, %v1040, 0.0
        %1117 = vadd.xlane.f32.xlu0 %v1116
        %v1118 = vpop.xlane.xlu0 %1117
        %v1119 = vsel %vm1112, %v1023, 0.0
        %1120 = vadd.xlane.f32.xlu0 %v1119
        %v1121 = vpop.xlane.xlu0 %1120
        %v1122 = vsel %vm1112, %v1041, 0.0
        %1123 = vadd.xlane.f32.xlu0 %v1122
        %v1124 = vpop.xlane.xlu0 %1123
        %v1125 = vsel %vm1112, %v1032, 0.0
        %1126 = vadd.xlane.f32.xlu0 %v1125
        %v1127 = vpop.xlane.xlu0 %1126
        %v1128 = vsel %vm1112, %v1042, 0.0
        %1129 = vadd.xlane.f32.xlu0 %v1128
        %v1130 = vpop.xlane.xlu0 %1129
        %v1131 = vsel %vm1112, %v1039, 0.0
        %1132 = vadd.xlane.f32.xlu0 %v1131
        %v1133 = vpop.xlane.xlu0 %1132
        %v1134 = vsel %vm1112, %v1043, 0.0
        %1135 = vadd.xlane.f32.xlu0 %v1134
        %v1136 = vpop.xlane.xlu0 %1135
        %v1137 = vsel %vm1112, %v1084, 0.0
        %1138 = vadd.xlane.f32.xlu0 %v1137
        %v1139 = vpop.xlane.xlu0 %1138
        %v1140 = vsel %vm1112, %v1108, 0.0
        %1141 = vadd.xlane.f32.xlu0 %v1140
        %v1142 = vpop.xlane.xlu0 %1141
        %v1143 = vsel %vm1112, %v1091, 0.0
        %1144 = vadd.xlane.f32.xlu0 %v1143
        %v1145 = vpop.xlane.xlu0 %1144
        %v1146 = vsel %vm1112, %v1109, 0.0
        %1147 = vadd.xlane.f32.xlu0 %v1146
        %v1148 = vpop.xlane.xlu0 %1147
        %v1149 = vsel %vm1112, %v1100, 0.0
        %1150 = vadd.xlane.f32.xlu0 %v1149
        %v1151 = vpop.xlane.xlu0 %1150
        %v1152 = vsel %vm1112, %v1110, 0.0
        %1153 = vadd.xlane.f32.xlu0 %v1152
        %v1154 = vpop.xlane.xlu0 %1153
        %v1155 = vsel %vm1112, %v1107, 0.0
        %1156 = vadd.xlane.f32.xlu0 %v1155
        %v1157 = vpop.xlane.xlu0 %1156
        %v1158 = vsel %vm1112, %v1111, 0.0
        %1159 = vadd.xlane.f32.xlu0 %v1158
        %v1160 = vpop.xlane.xlu0 %1159
        %v1161 = vmul.f32 %v1115, %v489
        %v1162 = vmul.f32 %v1118, %v489
        %v1163 = vmul.f32 %v1121, %v489
        %v1164 = vmul.f32 %v1124, %v489
        %v1165 = vmul.f32 %v1127, %v489
        %v1166 = vmul.f32 %v1130, %v489
        %v1167 = vmul.f32 %v1133, %v489
        %v1168 = vmul.f32 %v1136, %v489
        %v1169 = vmul.f32 %v1139, %v489
        %v1170 = vmul.f32 %v1142, %v489
        %v1171 = vmul.f32 %v1145, %v489
        %v1172 = vmul.f32 %v1148, %v489
        %v1173 = vmul.f32 %v1151, %v489
        %v1174 = vmul.f32 %v1154, %v489
        %v1175 = vmul.f32 %v1157, %v489
        %v1176 = vmul.f32 %v1160, %v489
        %v1177 = vsub.f32 %v1016, %v1161
        %v1178 = vsub.f32 %v1040, %v1162
        %v1179 = vsub.f32 %v1023, %v1163
        %v1180 = vsub.f32 %v1041, %v1164
        %v1181 = vsub.f32 %v1032, %v1165
        %v1182 = vsub.f32 %v1042, %v1166
        %v1183 = vsub.f32 %v1039, %v1167
        %v1184 = vsub.f32 %v1043, %v1168
        %v1185 = vsub.f32 %v1084, %v1169
        %v1186 = vsub.f32 %v1108, %v1170
        %v1187 = vsub.f32 %v1091, %v1171
        %v1188 = vsub.f32 %v1109, %v1172
        %v1189 = vsub.f32 %v1100, %v1173
        %v1190 = vsub.f32 %v1110, %v1174
        %v1191 = vsub.f32 %v1107, %v1175
        %v1192 = vsub.f32 %v1111, %v1176
        %v1193 = vmul.f32 %v1177, %v1177
        %v1194 = vmul.f32 %v1178, %v1178
        %v1195 = vmul.f32 %v1179, %v1179
        %v1196 = vmul.f32 %v1180, %v1180
        %v1197 = vmul.f32 %v1181, %v1181
        %v1198 = vmul.f32 %v1182, %v1182
        %v1199 = vmul.f32 %v1183, %v1183
        %v1200 = vmul.f32 %v1184, %v1184
        %v1201 = vmul.f32 %v1185, %v1185
        %v1202 = vmul.f32 %v1186, %v1186
        %v1203 = vmul.f32 %v1187, %v1187
        %v1204 = vmul.f32 %v1188, %v1188
        %v1205 = vmul.f32 %v1189, %v1189
        %v1206 = vmul.f32 %v1190, %v1190
        %v1207 = vmul.f32 %v1191, %v1191
        %v1208 = vmul.f32 %v1192, %v1192
        %v1209 = vsel %vm1112, %v1193, 0.0
        %1210 = vadd.xlane.f32.xlu0 %v1209
        %v1211 = vpop.xlane.xlu0 %1210
        %v1212 = vsel %vm1112, %v1194, 0.0
        %1213 = vadd.xlane.f32.xlu0 %v1212
        %v1214 = vpop.xlane.xlu0 %1213
        %v1215 = vsel %vm1112, %v1195, 0.0
        %1216 = vadd.xlane.f32.xlu0 %v1215
        %v1217 = vpop.xlane.xlu0 %1216
        %v1218 = vsel %vm1112, %v1196, 0.0
        %1219 = vadd.xlane.f32.xlu0 %v1218
        %v1220 = vpop.xlane.xlu0 %1219
        %v1221 = vsel %vm1112, %v1197, 0.0
        %1222 = vadd.xlane.f32.xlu0 %v1221
        %v1223 = vpop.xlane.xlu0 %1222
        %v1224 = vsel %vm1112, %v1198, 0.0
        %1225 = vadd.xlane.f32.xlu0 %v1224
        %v1226 = vpop.xlane.xlu0 %1225
        %v1227 = vsel %vm1112, %v1199, 0.0
        %1228 = vadd.xlane.f32.xlu0 %v1227
        %v1229 = vpop.xlane.xlu0 %1228
        %v1230 = vsel %vm1112, %v1200, 0.0
        %1231 = vadd.xlane.f32.xlu0 %v1230
        %v1232 = vpop.xlane.xlu0 %1231
        %v1233 = vsel %vm1112, %v1201, 0.0
        %1234 = vadd.xlane.f32.xlu0 %v1233
        %v1235 = vpop.xlane.xlu0 %1234
        %v1236 = vsel %vm1112, %v1202, 0.0
        %1237 = vadd.xlane.f32.xlu0 %v1236
        %v1238 = vpop.xlane.xlu0 %1237
        %v1239 = vsel %vm1112, %v1203, 0.0
        %1240 = vadd.xlane.f32.xlu0 %v1239
        %v1241 = vpop.xlane.xlu0 %1240
        %v1242 = vsel %vm1112, %v1204, 0.0
        %1243 = vadd.xlane.f32.xlu0 %v1242
        %v1244 = vpop.xlane.xlu0 %1243
        %v1245 = vsel %vm1112, %v1205, 0.0
        %1246 = vadd.xlane.f32.xlu0 %v1245
        %v1247 = vpop.xlane.xlu0 %1246
        %v1248 = vsel %vm1112, %v1206, 0.0
        %1249 = vadd.xlane.f32.xlu0 %v1248
        %v1250 = vpop.xlane.xlu0 %1249
        %v1251 = vsel %vm1112, %v1207, 0.0
        %1252 = vadd.xlane.f32.xlu0 %v1251
        %v1253 = vpop.xlane.xlu0 %1252
        %v1254 = vsel %vm1112, %v1208, 0.0
        %1255 = vadd.xlane.f32.xlu0 %v1254
        %v1256 = vpop.xlane.xlu0 %1255
        %v1257 = vmul.f32 %v1211, %v489
        %v1258 = vmul.f32 %v1214, %v489
        %v1259 = vmul.f32 %v1217, %v489
        %v1260 = vmul.f32 %v1220, %v489
        %v1261 = vmul.f32 %v1223, %v489
        %v1262 = vmul.f32 %v1226, %v489
        %v1263 = vmul.f32 %v1229, %v489
        %v1264 = vmul.f32 %v1232, %v489
        %v1265 = vmul.f32 %v1235, %v489
        %v1266 = vmul.f32 %v1238, %v489
        %v1267 = vmul.f32 %v1241, %v489
        %v1268 = vmul.f32 %v1244, %v489
        %v1269 = vmul.f32 %v1247, %v489
        %v1270 = vmul.f32 %v1250, %v489
        %v1271 = vmul.f32 %v1253, %v489
        %v1272 = vmul.f32 %v1256, %v489
        %v1273 = vadd.f32 %v1257, 1e-05
        %v1274 = vadd.f32 %v1258, 1e-05
        %v1275 = vadd.f32 %v1259, 1e-05
        %v1276 = vadd.f32 %v1260, 1e-05
        %v1277 = vadd.f32 %v1261, 1e-05
        %v1278 = vadd.f32 %v1262, 1e-05
        %v1279 = vadd.f32 %v1263, 1e-05
        %v1280 = vadd.f32 %v1264, 1e-05
        %v1281 = vadd.f32 %v1265, 1e-05
        %v1282 = vadd.f32 %v1266, 1e-05
        %v1283 = vadd.f32 %v1267, 1e-05
        %v1284 = vadd.f32 %v1268, 1e-05
        %v1285 = vadd.f32 %v1269, 1e-05
        %v1286 = vadd.f32 %v1270, 1e-05
        %v1287 = vadd.f32 %v1271, 1e-05
        %v1288 = vadd.f32 %v1272, 1e-05
        %v1289 = vrsqrt.pop %v1273
        %v1290 = vrsqrt.pop %v1274
        %v1291 = vrsqrt.pop %v1275
        %v1292 = vrsqrt.pop %v1276
        %v1293 = vrsqrt.pop %v1277
        %v1294 = vrsqrt.pop %v1278
        %v1295 = vrsqrt.pop %v1279
        %v1296 = vrsqrt.pop %v1280
        %v1297 = vrsqrt.pop %v1281
        %v1298 = vrsqrt.pop %v1282
        %v1299 = vrsqrt.pop %v1283
        %v1300 = vrsqrt.pop %v1284
        %v1301 = vrsqrt.pop %v1285
        %v1302 = vrsqrt.pop %v1286
        %v1303 = vrsqrt.pop %v1287
        %v1304 = vrsqrt.pop %v1288
        %v1305 = vmul.f32 %v1177, %v1289
        %v1306 = vmul.f32 %v1178, %v1290
        %v1307 = vmul.f32 %v1179, %v1291
        %v1308 = vmul.f32 %v1180, %v1292
        %v1309 = vmul.f32 %v1181, %v1293
        %v1310 = vmul.f32 %v1182, %v1294
        %v1311 = vmul.f32 %v1183, %v1295
        %v1312 = vmul.f32 %v1184, %v1296
        %v1313 = vmul.f32 %v1185, %v1297
        %v1314 = vmul.f32 %v1186, %v1298
        %v1315 = vmul.f32 %v1187, %v1299
        %v1316 = vmul.f32 %v1188, %v1300
        %v1317 = vmul.f32 %v1189, %v1301
        %v1318 = vmul.f32 %v1190, %v1302
        %v1319 = vmul.f32 %v1191, %v1303
        %v1320 = vmul.f32 %v1192, %v1304
        %v1321 = vcombine.low %v1305, %v1307
        %v1323 = vunpack.c.l.s4 1983009808
        %v1324 = vunpack.c.0.s8 %v1323
        %v1325 = vlaneseq
        %v1326 = vshrl.u32 %v1325, 7
        %v1327 = vsub.s32 %v1324, %v1326
        %v1328 = vrot.slane %v1321, %v1327
        %v1329 = vcombine.low %v1306, %v1308
        %v1331 = vunpack.c.l.s4 1983009808
        %v1332 = vunpack.c.0.s8 %v1331
        %v1333 = vlaneseq
        %v1334 = vshrl.u32 %v1333, 7
        %v1335 = vsub.s32 %v1332, %v1334
        %v1336 = vrot.slane %v1329, %v1335
        %v1337 = vcombine.low %v1309, %v1311
        %v1339 = vunpack.c.l.s4 1983009808
        %v1340 = vunpack.c.0.s8 %v1339
        %v1341 = vlaneseq
        %v1342 = vshrl.u32 %v1341, 7
        %v1343 = vsub.s32 %v1340, %v1342
        %v1344 = vrot.slane %v1337, %v1343
        %v1345 = vcombine.low %v1310, %v1312
        %v1347 = vunpack.c.l.s4 1983009808
        %v1348 = vunpack.c.0.s8 %v1347
        %v1349 = vlaneseq
        %v1350 = vshrl.u32 %v1349, 7
        %v1351 = vsub.s32 %v1348, %v1350
        %v1352 = vrot.slane %v1345, %v1351
        %v1353 = vcombine.low %v1328, %v1336
        %v1354 = vcombine.high %v1328, %v1336
        %v1356 = vunpack.c.l.s4 1934713408
        %v1357 = vunpack.c.0.s8 %v1356
        %v1358 = vlaneseq
        %v1359 = vshrl.u32 %v1358, 7
        %v1360 = vsub.s32 %v1357, %v1359
        %v1361 = vrot.slane %v1353, %v1360
        %v1363 = vunpack.c.l.s4 1934713408
        %v1364 = vunpack.c.0.s8 %v1363
        %v1365 = vlaneseq
        %v1366 = vshrl.u32 %v1365, 7
        %v1367 = vsub.s32 %v1364, %v1366
        %v1368 = vrot.slane %v1354, %v1367
        %v1369 = vcombine.low %v1344, %v1352
        %v1370 = vcombine.high %v1344, %v1352
        %v1372 = vunpack.c.l.s4 1934713408
        %v1373 = vunpack.c.0.s8 %v1372
        %v1374 = vlaneseq
        %v1375 = vshrl.u32 %v1374, 7
        %v1376 = vsub.s32 %v1373, %v1375
        %v1377 = vrot.slane %v1369, %v1376
        %v1379 = vunpack.c.l.s4 1934713408
        %v1380 = vunpack.c.0.s8 %v1379
        %v1381 = vlaneseq
        %v1382 = vshrl.u32 %v1381, 7
        %v1383 = vsub.s32 %v1380, %v1382
        %v1384 = vrot.slane %v1370, %v1383
        %v1385 = vcombine.low %v1361, %v1377
        %v1386 = vcombine.high %v1361, %v1377
        %v1387 = vcombine.low %v1368, %v1384
        %v1388 = vcombine.high %v1368, %v1384
        %v1389 = vcombine.low %v1313, %v1315
        %v1391 = vunpack.c.l.s4 1983009808
        %v1392 = vunpack.c.0.s8 %v1391
        %v1393 = vlaneseq
        %v1394 = vshrl.u32 %v1393, 7
        %v1395 = vsub.s32 %v1392, %v1394
        %v1396 = vrot.slane %v1389, %v1395
        %v1397 = vcombine.low %v1314, %v1316
        %v1399 = vunpack.c.l.s4 1983009808
        %v1400 = vunpack.c.0.s8 %v1399
        %v1401 = vlaneseq
        %v1402 = vshrl.u32 %v1401, 7
        %v1403 = vsub.s32 %v1400, %v1402
        %v1404 = vrot.slane %v1397, %v1403
        %v1405 = vcombine.low %v1317, %v1319
        %v1407 = vunpack.c.l.s4 1983009808
        %v1408 = vunpack.c.0.s8 %v1407
        %v1409 = vlaneseq
        %v1410 = vshrl.u32 %v1409, 7
        %v1411 = vsub.s32 %v1408, %v1410
        %v1412 = vrot.slane %v1405, %v1411
        %v1413 = vcombine.low %v1318, %v1320
        %v1415 = vunpack.c.l.s4 1983009808
        %v1416 = vunpack.c.0.s8 %v1415
        %v1417 = vlaneseq
        %v1418 = vshrl.u32 %v1417, 7
        %v1419 = vsub.s32 %v1416, %v1418
        %v1420 = vrot.slane %v1413, %v1419
        %v1421 = vcombine.low %v1396, %v1404
        %v1422 = vcombine.high %v1396, %v1404
        %v1424 = vunpack.c.l.s4 1934713408
        %v1425 = vunpack.c.0.s8 %v1424
        %v1426 = vlaneseq
        %v1427 = vshrl.u32 %v1426, 7
        %v1428 = vsub.s32 %v1425, %v1427
        %v1429 = vrot.slane %v1421, %v1428
        %v1431 = vunpack.c.l.s4 1934713408
        %v1432 = vunpack.c.0.s8 %v1431
        %v1433 = vlaneseq
        %v1434 = vshrl.u32 %v1433, 7
        %v1435 = vsub.s32 %v1432, %v1434
        %v1436 = vrot.slane %v1422, %v1435
        %v1437 = vcombine.low %v1412, %v1420
        %v1438 = vcombine.high %v1412, %v1420
        %v1440 = vunpack.c.l.s4 1934713408
        %v1441 = vunpack.c.0.s8 %v1440
        %v1442 = vlaneseq
        %v1443 = vshrl.u32 %v1442, 7
        %v1444 = vsub.s32 %v1441, %v1443
        %v1445 = vrot.slane %v1437, %v1444
        %v1447 = vunpack.c.l.s4 1934713408
        %v1448 = vunpack.c.0.s8 %v1447
        %v1449 = vlaneseq
        %v1450 = vshrl.u32 %v1449, 7
        %v1451 = vsub.s32 %v1448, %v1450
        %v1452 = vrot.slane %v1438, %v1451
        %v1453 = vcombine.low %v1429, %v1445
        %v1454 = vcombine.high %v1429, %v1445
        %v1455 = vcombine.low %v1436, %v1452
        %v1456 = vcombine.high %v1436, %v1452
        %v1457 = vld [vmem:[%s7] sm:$0xf]
        %v1459 = vlaneseq
        %v1460 = vshrl.u32 %v1459, 7
        %v1461 = vsub.s32 0, %v1460
        %v1462 = vrot.slane %v1457, %v1461
        %v1463 = vlaneseq
        %v1464 = vshrl.u32 %v1463, 7
        %v1465 = vsub.s32 1, %v1464
        %v1466 = vrot.slane %v1457, %v1465
        %v1467 = vlaneseq
        %v1468 = vshrl.u32 %v1467, 7
        %v1469 = vsub.s32 2, %v1468
        %v1470 = vrot.slane %v1457, %v1469
        %v1471 = vlaneseq
        %v1472 = vshrl.u32 %v1471, 7
        %v1473 = vsub.s32 3, %v1472
        %v1474 = vrot.slane %v1457, %v1473
        %v1479 = vmul.f32 %v1385, %v1462
        %v1480 = vmul.f32 %v1386, %v1466
        %v1481 = vmul.f32 %v1387, %v1470
        %v1482 = vmul.f32 %v1388, %v1474
        %v1483 = vmul.f32 %v1453, %v1462
        %v1484 = vmul.f32 %v1454, %v1466
        %v1485 = vmul.f32 %v1455, %v1470
        %v1486 = vmul.f32 %v1456, %v1474
        %v1487 = vld [vmem:[%s8] sm:$0xf]
        %v1489 = vlaneseq
        %v1490 = vshrl.u32 %v1489, 7
        %v1491 = vsub.s32 0, %v1490
        %v1492 = vrot.slane %v1487, %v1491
        %v1493 = vlaneseq
        %v1494 = vshrl.u32 %v1493, 7
        %v1495 = vsub.s32 1, %v1494
        %v1496 = vrot.slane %v1487, %v1495
        %v1497 = vlaneseq
        %v1498 = vshrl.u32 %v1497, 7
        %v1499 = vsub.s32 2, %v1498
        %v1500 = vrot.slane %v1487, %v1499
        %v1501 = vlaneseq
        %v1502 = vshrl.u32 %v1501, 7
        %v1503 = vsub.s32 3, %v1502
        %v1504 = vrot.slane %v1487, %v1503
        %v1509 = vadd.f32 %v1479, %v1492
        %v1510 = vadd.f32 %v1480, %v1496
        %v1511 = vadd.f32 %v1481, %v1500
        %v1512 = vadd.f32 %v1482, %v1504
        %v1513 = vadd.f32 %v1483, %v1492
        %v1514 = vadd.f32 %v1484, %v1496
        %v1515 = vadd.f32 %v1485, %v1500
        %v1516 = vadd.f32 %v1486, %v1504
        %v1517 = vxor.u32 %v1509, 2147483648
        %v1518 = vxor.u32 %v1510, 2147483648
        %v1519 = vxor.u32 %v1511, 2147483648
        %v1520 = vxor.u32 %v1512, 2147483648
        %v1521 = vxor.u32 %v1513, 2147483648
        %v1522 = vxor.u32 %v1514, 2147483648
        %v1523 = vxor.u32 %v1515, 2147483648
        %v1524 = vxor.u32 %v1516, 2147483648
        %v1525 = vmul.f32 %v1517, 1.442695
        %v1526 = vpow.pop %v1525
        %v1527 = vmul.f32 %v1518, 1.442695
        %v1528 = vpow.pop %v1527
        %v1529 = vmul.f32 %v1519, 1.442695
        %v1530 = vpow.pop %v1529
        %v1531 = vmul.f32 %v1520, 1.442695
        %v1532 = vpow.pop %v1531
        %v1533 = vmul.f32 %v1521, 1.442695
        %v1534 = vpow.pop %v1533
        %v1535 = vmul.f32 %v1522, 1.442695
        %v1536 = vpow.pop %v1535
        %v1537 = vmul.f32 %v1523, 1.442695
        %v1538 = vpow.pop %v1537
        %v1539 = vmul.f32 %v1524, 1.442695
        %v1540 = vpow.pop %v1539
        %v1541 = vadd.f32 %v1526, 1.0
        %v1542 = vadd.f32 %v1528, 1.0
        %v1543 = vadd.f32 %v1530, 1.0
        %v1544 = vadd.f32 %v1532, 1.0
        %v1545 = vadd.f32 %v1534, 1.0
        %v1546 = vadd.f32 %v1536, 1.0
        %v1547 = vadd.f32 %v1538, 1.0
        %v1548 = vadd.f32 %v1540, 1.0
        %v1549 = vrcp.pop %v1541
        %v1550 = vmul.f32 1.0, %v1549
        %v1551 = vrcp.pop %v1542
        %v1552 = vmul.f32 1.0, %v1551
        %v1553 = vrcp.pop %v1543
        %v1554 = vmul.f32 1.0, %v1553
        %v1555 = vrcp.pop %v1544
        %v1556 = vmul.f32 1.0, %v1555
        %v1557 = vrcp.pop %v1545
        %v1558 = vmul.f32 1.0, %v1557
        %v1559 = vrcp.pop %v1546
        %v1560 = vmul.f32 1.0, %v1559
        %v1561 = vrcp.pop %v1547
        %v1562 = vmul.f32 1.0, %v1561
        %v1563 = vrcp.pop %v1548
        %v1564 = vmul.f32 1.0, %v1563
        %v1565 = vmul.f32 %v1509, %v1550
        %v1566 = vmul.f32 %v1510, %v1552
        %v1567 = vmul.f32 %v1511, %v1554
        %v1568 = vmul.f32 %v1512, %v1556
        %v1569 = vmul.f32 %v1513, %v1558
        %v1570 = vmul.f32 %v1514, %v1560
        %v1571 = vmul.f32 %v1515, %v1562
        %v1572 = vmul.f32 %v1516, %v1564
        %v1573 = vpack.c.bf16 %v1569, %v1565
        %v1574 = vpack.c.bf16 %v1570, %v1566
        %v1575 = vpack.c.bf16 %v1571, %v1567
        %v1576 = vpack.c.bf16 %v1572, %v1568
        %v1577 = vld [vmem:[#allocation8] sm:$0xf]
        %v1578 = vld [vmem:[#allocation8 + $0x4] sm:$0xf]
        %v1579 = vld [vmem:[#allocation8 + $0x8] sm:$0xf]
        %v1580 = vld [vmem:[#allocation8 + $0xc] sm:$0xf]
        %v1581 = vld [vmem:[#allocation8 + $0x10] sm:$0xf]
        %v1582 = vld [vmem:[#allocation8 + $0x14] sm:$0xf]
        %v1583 = vld [vmem:[#allocation8 + $0x18] sm:$0xf]
        %v1584 = vld [vmem:[#allocation8 + $0x1c] sm:$0xf]
        %v1585 = vld [vmem:[#allocation8 + $0x20] sm:$0xf]
        %v1586 = vld [vmem:[#allocation8 + $0x24] sm:$0xf]
        %v1587 = vld [vmem:[#allocation8 + $0x28] sm:$0xf]
        %v1588 = vld [vmem:[#allocation8 + $0x2c] sm:$0xf]
        %v1589 = vld [vmem:[#allocation8 + $0x30] sm:$0xf]
        %v1590 = vld [vmem:[#allocation8 + $0x34] sm:$0xf]
        %v1591 = vld [vmem:[#allocation8 + $0x38] sm:$0xf]
        %v1592 = vld [vmem:[#allocation8 + $0x3c] sm:$0xf]
        %v1593 = vld [vmem:[#allocation8 + $0x40] sm:$0xf]
        %v1594 = vld [vmem:[#allocation8 + $0x44] sm:$0xf]
        %v1595 = vld [vmem:[#allocation8 + $0x48] sm:$0xf]
        %v1596 = vld [vmem:[#allocation8 + $0x4c] sm:$0xf]
        %v1597 = vld [vmem:[#allocation8 + $0x50] sm:$0xf]
        %v1598 = vld [vmem:[#allocation8 + $0x54] sm:$0xf]
        %v1599 = vld [vmem:[#allocation8 + $0x58] sm:$0xf]
        %v1600 = vld [vmem:[#allocation8 + $0x5c] sm:$0xf]
        %v1601 = vld [vmem:[#allocation8 + $0x60] sm:$0xf]
        %v1602 = vld [vmem:[#allocation8 + $0x64] sm:$0xf]
        %v1603 = vld [vmem:[#allocation8 + $0x68] sm:$0xf]
        %v1604 = vld [vmem:[#allocation8 + $0x6c] sm:$0xf]
        %v1605 = vld [vmem:[#allocation8 + $0x70] sm:$0xf]
        %v1606 = vld [vmem:[#allocation8 + $0x74] sm:$0xf]
        %v1607 = vld [vmem:[#allocation8 + $0x78] sm:$0xf]
        %v1608 = vld [vmem:[#allocation8 + $0x7c] sm:$0xf]
        %v1609 = vld [vmem:[#allocation8 + $0x80] sm:$0xf]
        %v1610 = vld [vmem:[#allocation8 + $0x84] sm:$0xf]
        %v1611 = vld [vmem:[#allocation8 + $0x88] sm:$0xf]
        %v1612 = vld [vmem:[#allocation8 + $0x8c] sm:$0xf]
        %v1613 = vld [vmem:[#allocation8 + $0x90] sm:$0xf]
        %v1614 = vld [vmem:[#allocation8 + $0x94] sm:$0xf]
        %v1615 = vld [vmem:[#allocation8 + $0x98] sm:$0xf]
        %v1616 = vld [vmem:[#allocation8 + $0x9c] sm:$0xf]
        %v1617 = vld [vmem:[#allocation8 + $0xa0] sm:$0xf]
        %v1618 = vld [vmem:[#allocation8 + $0xa4] sm:$0xf]
        %v1619 = vld [vmem:[#allocation8 + $0xa8] sm:$0xf]
        %v1620 = vld [vmem:[#allocation8 + $0xac] sm:$0xf]
        %v1621 = vld [vmem:[#allocation8 + $0xb0] sm:$0xf]
        %v1622 = vld [vmem:[#allocation8 + $0xb4] sm:$0xf]
        %v1623 = vld [vmem:[#allocation8 + $0xb8] sm:$0xf]
        %v1624 = vld [vmem:[#allocation8 + $0xbc] sm:$0xf]
        %v1625 = vld [vmem:[#allocation8 + $0xc0] sm:$0xf]
        %v1626 = vld [vmem:[#allocation8 + $0xc4] sm:$0xf]
        %v1627 = vld [vmem:[#allocation8 + $0xc8] sm:$0xf]
        %v1628 = vld [vmem:[#allocation8 + $0xcc] sm:$0xf]
        %v1629 = vld [vmem:[#allocation8 + $0xd0] sm:$0xf]
        %v1630 = vld [vmem:[#allocation8 + $0xd4] sm:$0xf]
        %v1631 = vld [vmem:[#allocation8 + $0xd8] sm:$0xf]
        %v1632 = vld [vmem:[#allocation8 + $0xdc] sm:$0xf]
        %v1633 = vld [vmem:[#allocation8 + $0xe0] sm:$0xf]
        %v1634 = vld [vmem:[#allocation8 + $0xe4] sm:$0xf]
        %v1635 = vld [vmem:[#allocation8 + $0xe8] sm:$0xf]
        %v1636 = vld [vmem:[#allocation8 + $0xec] sm:$0xf]
        %v1637 = vld [vmem:[#allocation8 + $0xf0] sm:$0xf]
        %v1638 = vld [vmem:[#allocation8 + $0xf4] sm:$0xf]
        %v1639 = vld [vmem:[#allocation8 + $0xf8] sm:$0xf]
        %v1640 = vld [vmem:[#allocation8 + $0xfc] sm:$0xf]
        %v1641 = vld [vmem:[%s10] sm:$0x1]
        %v1643 = vlaneseq
        %v1644 = vshrl.u32 %v1643, 7
        %v1645 = vsub.s32 0, %v1644
        %v1646 = vrot.slane %v1641, %v1645
        %v1712 = vunpack.c.l.b16 %v1577
        %v1713 = vunpack.c.l.b16 %v1578
        %v1714 = vunpack.c.l.b16 %v1579
        %v1715 = vunpack.c.l.b16 %v1580
        %v1716 = vunpack.c.l.b16 %v1581
        %v1717 = vunpack.c.l.b16 %v1582
        %v1718 = vunpack.c.l.b16 %v1583
        %v1719 = vunpack.c.l.b16 %v1584
        %v1720 = vunpack.c.l.b16 %v1585
        %v1721 = vunpack.c.l.b16 %v1586
        %v1722 = vunpack.c.l.b16 %v1587
        %v1723 = vunpack.c.l.b16 %v1588
        %v1724 = vunpack.c.l.b16 %v1589
        %v1725 = vunpack.c.l.b16 %v1590
        %v1726 = vunpack.c.l.b16 %v1591
        %v1727 = vunpack.c.l.b16 %v1592
        %v1728 = vunpack.c.l.b16 %v1593
        %v1729 = vunpack.c.l.b16 %v1594
        %v1730 = vunpack.c.l.b16 %v1595
        %v1731 = vunpack.c.l.b16 %v1596
        %v1732 = vunpack.c.l.b16 %v1597
        %v1733 = vunpack.c.l.b16 %v1598
        %v1734 = vunpack.c.l.b16 %v1599
        %v1735 = vunpack.c.l.b16 %v1600
        %v1736 = vunpack.c.l.b16 %v1601
        %v1737 = vunpack.c.l.b16 %v1602
        %v1738 = vunpack.c.l.b16 %v1603
        %v1739 = vunpack.c.l.b16 %v1604
        %v1740 = vunpack.c.l.b16 %v1605
        %v1741 = vunpack.c.l.b16 %v1606
        %v1742 = vunpack.c.l.b16 %v1607
        %v1743 = vunpack.c.l.b16 %v1608
        %v1744 = vunpack.c.l.b16 %v1609
        %v1745 = vunpack.c.l.b16 %v1610
        %v1746 = vunpack.c.l.b16 %v1611
        %v1747 = vunpack.c.l.b16 %v1612
        %v1748 = vunpack.c.l.b16 %v1613
        %v1749 = vunpack.c.l.b16 %v1614
        %v1750 = vunpack.c.l.b16 %v1615
        %v1751 = vunpack.c.l.b16 %v1616
        %v1752 = vunpack.c.l.b16 %v1617
        %v1753 = vunpack.c.l.b16 %v1618
        %v1754 = vunpack.c.l.b16 %v1619
        %v1755 = vunpack.c.l.b16 %v1620
        %v1756 = vunpack.c.l.b16 %v1621
        %v1757 = vunpack.c.l.b16 %v1622
        %v1758 = vunpack.c.l.b16 %v1623
        %v1759 = vunpack.c.l.b16 %v1624
        %v1760 = vunpack.c.l.b16 %v1625
        %v1761 = vunpack.c.l.b16 %v1626
        %v1762 = vunpack.c.l.b16 %v1627
        %v1763 = vunpack.c.l.b16 %v1628
        %v1764 = vunpack.c.l.b16 %v1629
        %v1765 = vunpack.c.l.b16 %v1630
        %v1766 = vunpack.c.l.b16 %v1631
        %v1767 = vunpack.c.l.b16 %v1632
        %v1768 = vunpack.c.l.b16 %v1633
        %v1769 = vunpack.c.l.b16 %v1634
        %v1770 = vunpack.c.l.b16 %v1635
        %v1771 = vunpack.c.l.b16 %v1636
        %v1772 = vunpack.c.l.b16 %v1637
        %v1773 = vunpack.c.l.b16 %v1638
        %v1774 = vunpack.c.l.b16 %v1639
        %v1775 = vunpack.c.l.b16 %v1640
        %v1776 = vpack.c.b16 %v1713, %v1712
        %v1777 = vpack.c.b16 %v1715, %v1714
        %v1778 = vpack.c.b16 %v1717, %v1716
        %v1779 = vpack.c.b16 %v1719, %v1718
        %v1780 = vpack.c.b16 %v1721, %v1720
        %v1781 = vpack.c.b16 %v1723, %v1722
        %v1782 = vpack.c.b16 %v1725, %v1724
        %v1783 = vpack.c.b16 %v1727, %v1726
        %v1784 = vpack.c.b16 %v1729, %v1728
        %v1785 = vpack.c.b16 %v1731, %v1730
        %v1786 = vpack.c.b16 %v1733, %v1732
        %v1787 = vpack.c.b16 %v1735, %v1734
        %v1788 = vpack.c.b16 %v1737, %v1736
        %v1789 = vpack.c.b16 %v1739, %v1738
        %v1790 = vpack.c.b16 %v1741, %v1740
        %v1791 = vpack.c.b16 %v1743, %v1742
        %v1792 = vpack.c.b16 %v1745, %v1744
        %v1793 = vpack.c.b16 %v1747, %v1746
        %v1794 = vpack.c.b16 %v1749, %v1748
        %v1795 = vpack.c.b16 %v1751, %v1750
        %v1796 = vpack.c.b16 %v1753, %v1752
        %v1797 = vpack.c.b16 %v1755, %v1754
        %v1798 = vpack.c.b16 %v1757, %v1756
        %v1799 = vpack.c.b16 %v1759, %v1758
        %v1800 = vpack.c.b16 %v1761, %v1760
        %v1801 = vpack.c.b16 %v1763, %v1762
        %v1802 = vpack.c.b16 %v1765, %v1764
        %v1803 = vpack.c.b16 %v1767, %v1766
        %v1804 = vpack.c.b16 %v1769, %v1768
        %v1805 = vpack.c.b16 %v1771, %v1770
        %v1806 = vpack.c.b16 %v1773, %v1772
        %v1807 = vpack.c.b16 %v1775, %v1774
        %1840 = vmatprep.subr.bf16.mxu0 0
        %1841 = vmatpush1.bf16.msra.mxu0 %v1776
        %1842 = vmatprep.subr.bf16.mxu0 0
        %1843 = vmatpush1.bf16.msra.mxu0 %v1777
        %1844 = vmatprep.subr.bf16.mxu0 0
        %1845 = vmatpush1.bf16.msra.mxu0 %v1778
        %1846 = vmatprep.subr.bf16.mxu0 0
        %1847 = vmatpush1.bf16.msra.mxu0 %v1779
        %1848 = vmatprep.subr.bf16.mxu0 0
        %1849 = vmatpush1.bf16.msra.mxu0 %v1780
        %1850 = vmatprep.subr.bf16.mxu0 0
        %1851 = vmatpush1.bf16.msra.mxu0 %v1781
        %1852 = vmatprep.subr.bf16.mxu0 0
        %1853 = vmatpush1.bf16.msra.mxu0 %v1782
        %1854 = vmatprep.subr.bf16.mxu0 0
        %1855 = vmatpush1.bf16.msra.mxu0 %v1783
        %1856 = vmatprep.subr.bf16.mxu0 0
        %1857 = vmatpush1.bf16.msra.mxu0 %v1784
        %1858 = vmatprep.subr.bf16.mxu0 0
        %1859 = vmatpush1.bf16.msra.mxu0 %v1785
        %1860 = vmatprep.subr.bf16.mxu0 0
        %1861 = vmatpush1.bf16.msra.mxu0 %v1786
        %1862 = vmatprep.subr.bf16.mxu0 0
        %1863 = vmatpush1.bf16.msra.mxu0 %v1787
        %1864 = vmatprep.subr.bf16.mxu0 0
        %1865 = vmatpush1.bf16.msra.mxu0 %v1788
        %1866 = vmatprep.subr.bf16.mxu0 0
        %1867 = vmatpush1.bf16.msra.mxu0 %v1789
        %1868 = vmatprep.subr.bf16.mxu0 0
        %1869 = vmatpush1.bf16.msra.mxu0 %v1790
        %1870 = vmatprep.subr.bf16.mxu0 0
        %1871 = vmatpush1.bf16.msra.mxu0 %v1791
        %1872 = vmatprep.mubr.bf16.mxu0 %v1574
        %1873 = vmatmul.mubr.bf16.gmra.mrb[0].mxu0 %v1573
        %v1874 = vpop.f32.mrb[0].mxu0
        %v1875 = vadd.f32 %v1646, %v1874
        %v1876 = vpop.f32.mrb[0].mxu0
        %v1877 = vpop.f32.mrb[0].mxu0
        %v1878 = vadd.f32 %v1646, %v1877
        %v1879 = vpop.f32.mrb[0].mxu0
        %1880 = vdwg.mxu0
        %1881 = vmatprep.subr.bf16.mxu0 0
        %1882 = vmatpush1.bf16.msra.mxu0 %v1792
        %1883 = vmatprep.subr.bf16.mxu0 0
        %1884 = vmatpush1.bf16.msra.mxu0 %v1793
        %1885 = vmatprep.subr.bf16.mxu0 0
        %1886 = vmatpush1.bf16.msra.mxu0 %v1794
        %1887 = vmatprep.subr.bf16.mxu0 0
        %1888 = vmatpush1.bf16.msra.mxu0 %v1795
        %1889 = vmatprep.subr.bf16.mxu0 0
        %1890 = vmatpush1.bf16.msra.mxu0 %v1796
        %1891 = vmatprep.subr.bf16.mxu0 0
        %1892 = vmatpush1.bf16.msra.mxu0 %v1797
        %1893 = vmatprep.subr.bf16.mxu0 0
        %1894 = vmatpush1.bf16.msra.mxu0 %v1798
        %1895 = vmatprep.subr.bf16.mxu0 0
        %1896 = vmatpush1.bf16.msra.mxu0 %v1799
        %1897 = vmatprep.subr.bf16.mxu0 0
        %1898 = vmatpush1.bf16.msra.mxu0 %v1800
        %1899 = vmatprep.subr.bf16.mxu0 0
        %1900 = vmatpush1.bf16.msra.mxu0 %v1801
        %1901 = vmatprep.subr.bf16.mxu0 0
        %1902 = vmatpush1.bf16.msra.mxu0 %v1802
        %1903 = vmatprep.subr.bf16.mxu0 0
        %1904 = vmatpush1.bf16.msra.mxu0 %v1803
        %1905 = vmatprep.subr.bf16.mxu0 0
        %1906 = vmatpush1.bf16.msra.mxu0 %v1804
        %1907 = vmatprep.subr.bf16.mxu0 0
        %1908 = vmatpush1.bf16.msra.mxu0 %v1805
        %1909 = vmatprep.subr.bf16.mxu0 0
        %1910 = vmatpush1.bf16.msra.mxu0 %v1806
        %1911 = vmatprep.subr.bf16.mxu0 0
        %1912 = vmatpush1.bf16.msra.mxu0 %v1807
        %1913 = vmatprep.mubr.bf16.mxu0 %v1576
        %1914 = vmatmul.mubr.bf16.gmra.mrb[0].mxu0 %v1575
        %v1915 = vpop.f32.mrb[0].mxu0
        %v1916 = vadd.f32 %v1875, %v1915
        %v1917 = vpop.f32.mrb[0].mxu0
        %v1918 = vpop.f32.mrb[0].mxu0
        %v1919 = vadd.f32 %v1878, %v1918
        %v1920 = vpop.f32.mrb[0].mxu0
        %1921 = vdwg.mxu0
        %s1922 = sld [smem:[#allocation2]]
        %v1923 = vstv %s1922
        %v1924 = vmul.f32 %v1923, %v483
        %v1925 = vmul.f32 %v1923, %v484
        %v1926 = vadd.f32 %v1916, %v1924
        %v1927 = vadd.f32 %v1919, %v1925
        %1928 = vst [vmem:[%s468] sm:$0xff] %v1926
        %1929 = vst [vmem:[%s468 + $0x8] sm:$0xff] %v1927
        %s1930 = sand.u32 %s299, 1
        %s1931 = scalar_lea.sflag [#allocation5], %s1930
        %s1932 = sand.u32 %s299, 1
        %s1933 = smul.addr %s1932, 16
        %s1934 = scalar_lea.vmem [#allocation9], %s1933
        // Predicated region
        $region81: #{tpu_custom_call.1} parent=67 // pred_check
          %p1935 = pneg %p309
        $region82: #{tpu_custom_call.1} parent=67 // pred_check_branch
          %1937 = sbr.rel (%p1935) target = $region84
        $region83: #{tpu_custom_call.1} parent=67 // pred_region
          %s1938 = smul.u32 2, %s29
          %s1940 = ssub.s32 256, 256
          %1941 = vsyncadd %s1931, %s1940
          %s1942 = smul.addr %s1938, 128
          %s1943 = scalar_lea.hbm %s12, %s1942
          %s1944 = sshll.u32 %s1934, 4
          %s1945 = int_to_ptr.vmem [resolvable:$true] %s1944
          %1950 = dma.vmem_to_hbm [thread:$0]  %s1945, 256, %s1943, %s1931, 128, 128, 8
        $region84: #{tpu_custom_call.1} parent=67 // pred_fallthru
          _
      $region68: #{tpu_custom_call.1} parent=5 // pred_fallthru
        _
      %p1951 = scmp.le.s32.totalorder 2, %s24
      // Predicated region
      $region85: #{tpu_custom_call.1} parent=5 // pred_check
        %p1952 = pneg %p1951
      $region86: #{tpu_custom_call.1} parent=5 // pred_check_branch
        %1954 = sbr.rel (%p1952) target = $region88
      $region87: #{tpu_custom_call.1} parent=5 // pred_region
        %s1955 = ssub.s32 %s24, 2
        // Predicated region
        $region89: #{tpu_custom_call.1} parent=87 // pred_check
          %p1956 = pneg %p315
        $region90: #{tpu_custom_call.1} parent=87 // pred_check_branch
          %1958 = sbr.rel (%p1956) target = $region92
        $region91: #{tpu_custom_call.1} parent=87 // pred_region
          %s1959 = sand.u32 %s300, 1
          %s1960 = scalar_lea.sflag [#allocation5], %s1959
          %s1961 = sand.u32 %s300, 1
          %s1962 = smul.addr %s1961, 16
          %s1963 = scalar_lea.vmem [#allocation9], %s1962
          %1964 = dma.done %s1960, 256
        $region92: #{tpu_custom_call.1} parent=87 // pred_fallthru
          _
      $region88: #{tpu_custom_call.1} parent=5 // pred_fallthru
        _
    $region6: #{tpu_custom_call.1} parent=1 // loop_footer
      %s28 = sadd.s32 1, %s24
    $region7: #{tpu_custom_call.1} parent=1 // loop_footer_branch
      %23 = sbr.rel target = $region3
    $region8: #{tpu_custom_call.1} parent=1 // loop_exit
      _
    %1965 = vsyncpa [#allocation4], 1
    %s1966 = scalar_lea.sflag [#allocation4], 1
    %1967 = vsyncpa %s1966, 1
    %1968 = vsyncpa [#allocation7], 1
    %1969 = vsyncpa [#allocation5], 1
    %s1970 = scalar_lea.sflag [#allocation5], 1
    %1971 = vsyncpa %s1970, 1

</llo_original>
